<compile_context>
chip_gen: v5e
topology: v5e:2x2
jax: 0.10.0
libtpu: 0.0.40
codegen_flags: <defaults>
</compile_context>

<pallas_src>
import math

import jax
import jax.numpy as jnp
from jax.experimental import pallas as pl
from jax.experimental.pallas import tpu as pltpu


def _gelu_tanh(x):
    # tanh-approximate GELU: the transcendental goes to the EUP slot instead of
    # a long erf polynomial on the VALU.
    # TODO(synk): nn.GELU() default is the exact erf form; the tanh
    # approximation deviates by <~1e-3 per element.  Swap back to
    # 0.5*x*(1+erf(x/sqrt(2))) if bit-tight parity with PyTorch is required.
    return jax.nn.gelu(x, approximate=True)


def projection_head_kernel(x_ref, w1_ref, w2_ref, params_ref, o_ref):
    # params_ref rows: 0 -> b1, 1 -> b2, 2 -> gamma, 3 -> beta (rows 4..7 pad).
    b1 = params_ref[0:1, :]
    b2 = params_ref[1:2, :]
    gamma = params_ref[2:3, :]
    beta = params_ref[3:4, :]

    # projection = Linear(embedding_dim -> projection_dim)
    # bf16 operands (cast once in the wrapper), f32 accumulation on the MXU.
    projected = jnp.dot(x_ref[...], w1_ref[...],
                        preferred_element_type=jnp.float32) + b1

    # GELU (f32 elementwise; tanh -> EUP).
    h = _gelu_tanh(projected)

    # fc = Linear(projection_dim -> projection_dim); feed MXU in weight dtype.
    y = jnp.dot(h.astype(w2_ref.dtype), w2_ref[...],
                preferred_element_type=jnp.float32) + b2

    # Dropout is identity in eval mode; residual add.
    y = y + projected

    # LayerNorm over last dim (eps = 1e-5, elementwise affine), f32 statistics.
    mean = jnp.mean(y, axis=-1, keepdims=True)
    centered = y - mean
    var = jnp.mean(centered * centered, axis=-1, keepdims=True)
    inv = jax.lax.rsqrt(var + 1e-5)
    o_ref[...] = (centered * inv * gamma + beta).astype(o_ref.dtype)


def _round_up(x, m):
    return ((x + m - 1) // m) * m


def _pick_batch_tile(B, batch_tile):
    # Big tiles amortize the ~0.35 us per-grid-step overhead; VMEM is not a
    # constraint at these shapes (even bt=1024 f32 is a few MiB).
    bt = min(batch_tile, _round_up(B, 8))
    # v7x has 2 TensorCores: keep >=2 "parallel" grid steps when doing so still
    # leaves >=256 rows per step (don't shrink tiles for single-TC v5e/v6e).
    if B >= 512:
        two_step = _round_up(pl.cdiv(B, 2), 8)
        if two_step >= 256:
            bt = min(bt, two_step)
    return bt


def projection_head(x, w1, b1, w2, b2, gamma, beta, *,
                    batch_tile=512, mxu_dtype=jnp.bfloat16):
    """x: [B, E]; w1: [E, P]; w2: [P, P]; b1/b2/gamma/beta: [P]."""
    B, E = x.shape
    P = w1.shape[1]
    out_dtype = x.dtype

    bt = _pick_batch_tile(B, batch_tile)
    # Partial last block (if B % bt != 0) handled by Pallas via masked store;
    # no wrapper-side pad/slice HBM round trip.
    grid = (pl.cdiv(B, bt),)

    # bf16 MXU operands (f32 accumulation inside the kernel); cast once here so
    # both matmuls hit the native bf16 MXU path instead of f32 emulation.
    x = x.astype(mxu_dtype)
    w1 = w1.astype(mxu_dtype)
    w2 = w2.astype(mxu_dtype)

    # Pack per-channel params into a single resident f32 slab padded to a full
    # (8, P) sublane-aligned tile; cast once here, not every grid step.
    params = jnp.stack([b1, b2, gamma, beta], axis=0).astype(jnp.float32)
    params = jnp.concatenate([params, jnp.zeros((4, P), jnp.float32)], axis=0)

    return pl.pallas_call(
        projection_head_kernel,
        out_shape=jax.ShapeDtypeStruct((B, P), out_dtype),
        grid_spec=pltpu.PrefetchScalarGridSpec(
            num_scalar_prefetch=0,
            grid=grid,
            in_specs=[
                pl.BlockSpec((bt, E), lambda i: (i, 0)),   # x tile
                pl.BlockSpec((E, P), lambda i: (0, 0)),    # W1 (resident)
                pl.BlockSpec((P, P), lambda i: (0, 0)),    # W2 (resident)
                pl.BlockSpec((8, P), lambda i: (0, 0)),    # b1/b2/gamma/beta
            ],
            out_specs=pl.BlockSpec((bt, P), lambda i: (i, 0)),
        ),
        compiler_params=pltpu.CompilerParams(
            dimension_semantics=("parallel",)),
    )(x, w1, w2, params)


def _reference(x, w1, b1, w2, b2, gamma, beta):
    # Pure-f32 reference with the exact-erf GELU (nn.GELU default).
    xf = x.astype(jnp.float32)
    projected = xf @ w1.astype(jnp.float32) + b1
    h = 0.5 * projected * (1.0 + jax.lax.erf(projected * (1.0 / math.sqrt(2.0))))
    y = h @ w2.astype(jnp.float32) + b2
    y = y + projected
    mean = jnp.mean(y, axis=-1, keepdims=True)
    var = jnp.mean((y - mean) ** 2, axis=-1, keepdims=True)
    return ((y - mean) / jnp.sqrt(var + 1e-5)) * gamma + beta


if __name__ == "__main__":
    # Shapes consistent with the module: embedding_dim=32, projection_dim=256
    # (module default).  B=200 is small; the second call below uses a smaller
    # tile so the grid has 2 steps with a partial last block (exercises the
    # masked edge-store path).
    B, E, P = 200, 32, 256

    key = jax.random.PRNGKey(0)
    kx, kw1, kb1, kw2, kb2, kg, kbt = jax.random.split(key, 7)

    x = jax.random.normal(kx, (B, E), dtype=jnp.float32)

    # PyTorch-like Linear init: U(-1/sqrt(fan_in), 1/sqrt(fan_in)), stored
    # transposed as [in, out] so the kernel does x @ W.
    lim1 = 1.0 / math.sqrt(E)
    w1 = jax.random.uniform(kw1, (E, P), jnp.float32, -lim1, lim1)
    b1 = jax.random.uniform(kb1, (P,), jnp.float32, -lim1, lim1)

    lim2 = 1.0 / math.sqrt(P)
    w2 = jax.random.uniform(kw2, (P, P), jnp.float32, -lim2, lim2)
    b2 = jax.random.uniform(kb2, (P,), jnp.float32, -lim2, lim2)

    # Non-trivial LayerNorm affine params so the affine path is exercised.
    gamma = jax.random.uniform(kg, (P,), jnp.float32, 0.5, 1.5)
    beta = 0.1 * jax.random.normal(kbt, (P,), dtype=jnp.float32)

    ref = _reference(x, w1, b1, w2, b2, gamma, beta)

    # Default tile: single grid step.
    out = projection_head(x, w1, b1, w2, b2, gamma, beta)
    out = jax.block_until_ready(out)
    assert out.shape == (B, P), out.shape
    # Tolerance accounts for bf16 MXU operands + tanh-GELU vs the f32/erf ref.
    err = float(jnp.max(jnp.abs(out - ref)))
    assert err < 8e-2, err

    # Smaller tile: 2-step grid with a partial last block (masked store path).
    out2 = projection_head(x, w1, b1, w2, b2, gamma, beta, batch_tile=128)
    out2 = jax.block_until_ready(out2)
    err2 = float(jnp.max(jnp.abs(out2 - ref)))
    assert err2 < 8e-2, err2

    print("KERNEL_OK")
</pallas_src>

<mosaic_0001>
module attributes {stable_mosaic.version = 11 : i64} {
  func.func @projection_head_kernel(%arg0: i32, %arg1: memref<200x32xbf16, #tpu.memory_space<vmem>>, %arg2: memref<32x256xbf16, #tpu.memory_space<vmem>>, %arg3: memref<256x256xbf16, #tpu.memory_space<vmem>>, %arg4: memref<8x256xf32, #tpu.memory_space<vmem>>, %arg5: memref<200x256xf32, #tpu.memory_space<vmem>>) attributes {dimension_semantics = [#tpu.dimension_semantics<parallel>], iteration_bounds = array<i64: 1>, scalar_prefetch = 0 : i64, scratch_operands = 0 : i64, tpu.core_type = #tpu.core_type<tc>, window_params = [{transform_indices = @transform_0, window_bounds = array<i64: 200, 32>}, {pipeline_mode = #tpu.pipeline_mode<synchronous>, transform_indices = @transform_1, window_bounds = array<i64: 32, 256>}, {pipeline_mode = #tpu.pipeline_mode<synchronous>, transform_indices = @transform_2, window_bounds = array<i64: 256, 256>}, {pipeline_mode = #tpu.pipeline_mode<synchronous>, transform_indices = @transform_3, window_bounds = array<i64: 8, 256>}, {transform_indices = @transform_4, window_bounds = array<i64: 200, 256>}]} {
    %c0 = arith.constant 0 : index
    %c0_0 = arith.constant 0 : index
    %0 = vector.load %arg4[%c0, %c0_0] : memref<8x256xf32, #tpu.memory_space<vmem>>, vector<1x256xf32>
    %c1 = arith.constant 1 : index
    %c0_1 = arith.constant 0 : index
    %1 = vector.load %arg4[%c1, %c0_1] : memref<8x256xf32, #tpu.memory_space<vmem>>, vector<1x256xf32>
    %c2 = arith.constant 2 : index
    %c0_2 = arith.constant 0 : index
    %2 = vector.load %arg4[%c2, %c0_2] : memref<8x256xf32, #tpu.memory_space<vmem>>, vector<1x256xf32>
    %c3 = arith.constant 3 : index
    %c0_3 = arith.constant 0 : index
    %3 = vector.load %arg4[%c3, %c0_3] : memref<8x256xf32, #tpu.memory_space<vmem>>, vector<1x256xf32>
    %c0_4 = arith.constant 0 : index
    %c0_5 = arith.constant 0 : index
    %4 = vector.load %arg1[%c0_4, %c0_5] : memref<200x32xbf16, #tpu.memory_space<vmem>>, vector<200x32xbf16>
    %c0_6 = arith.constant 0 : index
    %c0_7 = arith.constant 0 : index
    %5 = vector.load %arg2[%c0_6, %c0_7] : memref<32x256xbf16, #tpu.memory_space<vmem>>, vector<32x256xbf16>
    %cst = arith.constant dense<0.000000e+00> : vector<200x256xf32>
    %6 = tpu.matmul %4, %5, %cst {dimension_numbers = #tpu.dot_dimension_numbers<[1], [0], [0], [1], [0, 0, 1, 1], [], []>} : vector<200x32xbf16>, vector<32x256xbf16>, vector<200x256xf32> -> vector<200x256xf32>
    %7 = vector.broadcast %0 : vector<1x256xf32> to vector<200x256xf32>
    %8 = arith.addf %6, %7 : vector<200x256xf32>
    %9 = arith.mulf %8, %8 : vector<200x256xf32>
    %10 = arith.mulf %8, %9 : vector<200x256xf32>
    %cst_8 = arith.constant 4.471500e-02 : f32
    %11 = vector.broadcast %cst_8 : f32 to vector<200x256xf32>
    %12 = arith.mulf %11, %10 : vector<200x256xf32>
    %13 = arith.addf %8, %12 : vector<200x256xf32>
    %cst_9 = arith.constant 0.797884583 : f32
    %14 = vector.broadcast %cst_9 : f32 to vector<200x256xf32>
    %15 = arith.mulf %14, %13 : vector<200x256xf32>
    %16 = math.tanh %15 : vector<200x256xf32>
    %cst_10 = arith.constant 1.000000e+00 : f32
    %17 = vector.broadcast %cst_10 : f32 to vector<200x256xf32>
    %18 = arith.addf %17, %16 : vector<200x256xf32>
    %cst_11 = arith.constant 5.000000e-01 : f32
    %19 = vector.broadcast %cst_11 : f32 to vector<200x256xf32>
    %20 = arith.mulf %19, %18 : vector<200x256xf32>
    %21 = arith.mulf %8, %20 : vector<200x256xf32>
    %22 = arith.truncf %21 : vector<200x256xf32> to vector<200x256xbf16>
    %c0_12 = arith.constant 0 : index
    %c0_13 = arith.constant 0 : index
    %23 = vector.load %arg3[%c0_12, %c0_13] : memref<256x256xbf16, #tpu.memory_space<vmem>>, vector<256x256xbf16>
    %cst_14 = arith.constant dense<0.000000e+00> : vector<200x256xf32>
    %24 = tpu.matmul %22, %23, %cst_14 {dimension_numbers = #tpu.dot_dimension_numbers<[1], [0], [0], [1], [0, 0, 1, 1], [], []>} : vector<200x256xbf16>, vector<256x256xbf16>, vector<200x256xf32> -> vector<200x256xf32>
    %25 = vector.broadcast %1 : vector<1x256xf32> to vector<200x256xf32>
    %26 = arith.addf %24, %25 : vector<200x256xf32>
    %27 = arith.addf %26, %8 : vector<200x256xf32>
    %cst_15 = arith.constant dense<0.000000e+00> : vector<200xf32>
    %28 = vector.multi_reduction <add>, %27, %cst_15 [1] : vector<200x256xf32> to vector<200xf32>
    %29 = vector.shape_cast %28 : vector<200xf32> to vector<200x1xf32>
    %cst_16 = arith.constant 2.560000e+02 : f32
    %30 = vector.broadcast %cst_16 : f32 to vector<200x1xf32>
    %31 = arith.divf %29, %30 : vector<200x1xf32>
    %32 = vector.broadcast %31 : vector<200x1xf32> to vector<200x256xf32>
    %33 = arith.subf %27, %32 : vector<200x256xf32>
    %34 = arith.mulf %33, %33 : vector<200x256xf32>
    %cst_17 = arith.constant dense<0.000000e+00> : vector<200xf32>
    %35 = vector.multi_reduction <add>, %34, %cst_17 [1] : vector<200x256xf32> to vector<200xf32>
    %36 = vector.shape_cast %35 : vector<200xf32> to vector<200x1xf32>
    %cst_18 = arith.constant 2.560000e+02 : f32
    %37 = vector.broadcast %cst_18 : f32 to vector<200x1xf32>
    %38 = arith.divf %36, %37 : vector<200x1xf32>
    %cst_19 = arith.constant 9.99999974E-6 : f32
    %39 = vector.broadcast %cst_19 : f32 to vector<200x1xf32>
    %40 = arith.addf %38, %39 : vector<200x1xf32>
    %41 = math.rsqrt %40 : vector<200x1xf32>
    %42 = vector.broadcast %41 : vector<200x1xf32> to vector<200x256xf32>
    %43 = arith.mulf %33, %42 : vector<200x256xf32>
    %44 = vector.broadcast %2 : vector<1x256xf32> to vector<200x256xf32>
    %45 = arith.mulf %43, %44 : vector<200x256xf32>
    %46 = vector.broadcast %3 : vector<1x256xf32> to vector<200x256xf32>
    %47 = arith.addf %45, %46 : vector<200x256xf32>
    %c0_20 = arith.constant 0 : index
    %c0_21 = arith.constant 0 : index
    %48 = vector.load %arg5[%c0_20, %c0_21] : memref<200x256xf32, #tpu.memory_space<vmem>>, vector<200x256xf32>
    tpu.vector_store %arg5[%c0_20, %c0_21], %47 {strides = array<i32>} : memref<200x256xf32, #tpu.memory_space<vmem>>, vector<200x256xf32>,
    return
  }
  func.func @transform_0(%arg0: i32) -> (i32, i32) {
    %c0_i32 = arith.constant 0 : i32
    %c0_i32_0 = arith.constant 0 : i32
    return %arg0, %c0_i32 : i32, i32
  }
  func.func @transform_1(%arg0: i32) -> (i32, i32) {
    %c0_i32 = arith.constant 0 : i32
    %c0_i32_0 = arith.constant 0 : i32
    %c0_i32_1 = arith.constant 0 : i32
    return %c0_i32, %c0_i32_0 : i32, i32
  }
  func.func @transform_2(%arg0: i32) -> (i32, i32) {
    %c0_i32 = arith.constant 0 : i32
    %c0_i32_0 = arith.constant 0 : i32
    %c0_i32_1 = arith.constant 0 : i32
    return %c0_i32, %c0_i32_0 : i32, i32
  }
  func.func @transform_3(%arg0: i32) -> (i32, i32) {
    %c0_i32 = arith.constant 0 : i32
    %c0_i32_0 = arith.constant 0 : i32
    %c0_i32_1 = arith.constant 0 : i32
    return %c0_i32, %c0_i32_0 : i32, i32
  }
  func.func @transform_4(%arg0: i32) -> (i32, i32) {
    %c0_i32 = arith.constant 0 : i32
    %c0_i32_0 = arith.constant 0 : i32
    return %arg0, %c0_i32 : i32, i32
  }
}

</mosaic_0001>

<llo_original>
// kernel: tpu_custom_call.1
$region0: #{tpu_custom_call.1}
  #allocation0 [shape = 'u32[]', space=smem, size = 0x4, offset = 0x4, fixed_abs, tag = 'smem constant byte address 0x4 - core index']
  #allocation1 [shape = 'u32[72,128]{1,0:T(1,128)}', space=vmem, size = 0x9000, scoped, tag = 'internal scratch']
  %s0 = inlined_call_operand.vmem [shape: bf16[200,32], index: 0, kind: input, shape index: {}]
  %s1 = inlined_call_operand.vmem [shape: bf16[32,256], index: 1, kind: input, shape index: {}]
  %s2 = inlined_call_operand.hbm [shape: bf16[256,256], index: 2, kind: input, shape index: {}]
  %s3 = inlined_call_operand.vmem [shape: f32[8,256], index: 3, kind: input, shape index: {}]
  %s4 = inlined_call_operand.hbm [shape: f32[200,256], index: 4, kind: output, shape index: {}]
  %s5 = sld [smem:[#allocation0]]
  $region30: #{tpu_custom_call.1} parent=0
    _
  %s7 = ssub.s32 1, %s5
  %s8 = scalar_select 0, %s7, %s5
  $region1: #{tpu_custom_call.1} parent=0
    #allocation2 [shape = 'u8[131072]{0}', space=vmem, size = 0x20000, scoped, tag = 'input window, operand 2, single buffered']
    #allocation3 [shape = 's32[1]{0}', space=sflag, size = 0x4, scoped, tag = 'scoped memory for tpu_custom_call.1']
    #allocation4 [shape = 's32[1]{0}', space=sflag, size = 0x4, scoped, tag = 'scoped memory for tpu_custom_call.1']
    #allocation5 [shape = 'u8[204800]{0}', space=vmem, size = 0x32000, scoped, tag = 'output window, operand 0, single buffered']
    %9 = vsyncpa [#allocation3], 0
    %10 = vsyncpa [#allocation4], 0
    // Predicated region
    $region2: #{tpu_custom_call.1} parent=1 // pred_check
      _
    $region3: #{tpu_custom_call.1} parent=1 // pred_check_branch
      %12 = sbr.rel (0) target = $region5
    $region4: #{tpu_custom_call.1} parent=1 // pred_region
      _
    $region5: #{tpu_custom_call.1} parent=1 // pred_fallthru
      _
    // Predicated region
    $region6: #{tpu_custom_call.1} parent=1 // pred_check
      _
    $region7: #{tpu_custom_call.1} parent=1 // pred_check_branch
      %14 = sbr.rel (0) target = $region9
    $region8: #{tpu_custom_call.1} parent=1 // pred_region
      _
    $region9: #{tpu_custom_call.1} parent=1 // pred_fallthru
      _
    // Predicated region
    $region10: #{tpu_custom_call.1} parent=1 // pred_check
      _
    $region11: #{tpu_custom_call.1} parent=1 // pred_check_branch
      %16 = sbr.rel (0) target = $region13
    $region12: #{tpu_custom_call.1} parent=1 // pred_region
      %18 = vsyncadd [#allocation3], 0
      %s19 = sshll.u32 %s2, 4
      %s20 = int_to_ptr.hbm [resolvable:$true] %s19
      %s21 = sshll.u32 [#allocation2], 4
      %s22 = int_to_ptr.vmem [resolvable:$true] %s21
      %27 = dma.hbm_to_vmem [thread:$0]  %s20, 4096, %s22, [#allocation3], 128, 128, 8
    $region13: #{tpu_custom_call.1} parent=1 // pred_fallthru
      _
    // Predicated region
    $region14: #{tpu_custom_call.1} parent=1 // pred_check
      _
    $region15: #{tpu_custom_call.1} parent=1 // pred_check_branch
      %29 = sbr.rel (0) target = $region17
    $region16: #{tpu_custom_call.1} parent=1 // pred_region
      _
    $region17: #{tpu_custom_call.1} parent=1 // pred_fallthru
      _
    // Predicated region
    $region18: #{tpu_custom_call.1} parent=1 // pred_check
      _
    $region19: #{tpu_custom_call.1} parent=1 // pred_check_branch
      %31 = sbr.rel (0) target = $region21
    $region20: #{tpu_custom_call.1} parent=1 // pred_region
      %33 = dma.done [#allocation3], 4096
    $region21: #{tpu_custom_call.1} parent=1 // pred_fallthru
      _
    %v35 = vld [vmem:[%s3] ss:$8 sm:$0x3]
    %s36 = scalar_lea.vmem %s3, 1
    %v37 = vld [vmem:[%s36] ss:$8 sm:$0x3]
    %s38 = scalar_lea.vmem %s3, 2
    %v39 = vld [vmem:[%s38] ss:$8 sm:$0x3]
    %s40 = scalar_lea.vmem %s3, 3
    %v41 = vld [vmem:[%s40] ss:$8 sm:$0x3]
    %v42 = vld [vmem:[%s0] sm:$0xf]
    %v43 = vld [vmem:[%s0 + $0x4] sm:$0xf]
    %v44 = vld [vmem:[%s0 + $0x8] sm:$0xf]
    %v45 = vld [vmem:[%s0 + $0xc] sm:$0xf]
    %v46 = vld [vmem:[%s0 + $0x10] sm:$0xf]
    %v47 = vld [vmem:[%s0 + $0x14] sm:$0xf]
    %v48 = vld [vmem:[%s0 + $0x18] sm:$0xf]
    %v49 = vld [vmem:[%s0 + $0x1c] sm:$0xf]
    %v50 = vld [vmem:[%s0 + $0x20] sm:$0xf]
    %v51 = vld [vmem:[%s0 + $0x24] sm:$0xf]
    %v52 = vld [vmem:[%s0 + $0x28] sm:$0xf]
    %v53 = vld [vmem:[%s0 + $0x2c] sm:$0xf]
    %v54 = vld [vmem:[%s0 + $0x30] sm:$0xf]
    %v55 = vld [vmem:[%s0 + $0x34] sm:$0xf]
    %v56 = vld [vmem:[%s0 + $0x38] sm:$0xf]
    %v57 = vld [vmem:[%s0 + $0x3c] sm:$0xf]
    %v58 = vld [vmem:[%s0 + $0x40] sm:$0xf]
    %v59 = vld [vmem:[%s0 + $0x44] sm:$0xf]
    %v60 = vld [vmem:[%s0 + $0x48] sm:$0xf]
    %v61 = vld [vmem:[%s0 + $0x4c] sm:$0xf]
    %v62 = vld [vmem:[%s0 + $0x50] sm:$0xf]
    %v63 = vld [vmem:[%s0 + $0x54] sm:$0xf]
    %v64 = vld [vmem:[%s0 + $0x58] sm:$0xf]
    %v65 = vld [vmem:[%s0 + $0x5c] sm:$0xf]
    %v66 = vld [vmem:[%s0 + $0x60] sm:$0xf]
    %v67 = vld [vmem:[%s1] sm:$0xff]
    %v68 = vld [vmem:[%s1 + $0x8] sm:$0xff]
    %v69 = vld [vmem:[%s1 + $0x10] sm:$0xff]
    %v70 = vld [vmem:[%s1 + $0x18] sm:$0xff]
    %v72 = vperm.slane %v35, 0
    %v73 = vperm.slane %v35, 1
    %v101 = vunpack.c.l.b16 %v42
    %v102 = vunpack.c.l.b16 %v43
    %v103 = vunpack.c.l.b16 %v44
    %v104 = vunpack.c.l.b16 %v45
    %v105 = vunpack.c.l.b16 %v46
    %v106 = vunpack.c.l.b16 %v47
    %v107 = vunpack.c.l.b16 %v48
    %v108 = vunpack.c.l.b16 %v49
    %v109 = vunpack.c.l.b16 %v50
    %v110 = vunpack.c.l.b16 %v51
    %v111 = vunpack.c.l.b16 %v52
    %v112 = vunpack.c.l.b16 %v53
    %v113 = vunpack.c.l.b16 %v54
    %v114 = vunpack.c.l.b16 %v55
    %v115 = vunpack.c.l.b16 %v56
    %v116 = vunpack.c.l.b16 %v57
    %v117 = vunpack.c.l.b16 %v58
    %v118 = vunpack.c.l.b16 %v59
    %v119 = vunpack.c.l.b16 %v60
    %v120 = vunpack.c.l.b16 %v61
    %v121 = vunpack.c.l.b16 %v62
    %v122 = vunpack.c.l.b16 %v63
    %v123 = vunpack.c.l.b16 %v64
    %v124 = vunpack.c.l.b16 %v65
    %v125 = vunpack.c.l.b16 %v66
    %v126 = vpack.c.b16 %v102, %v101
    %v127 = vpack.c.b16 %v104, %v103
    %v128 = vpack.c.b16 %v106, %v105
    %v129 = vpack.c.b16 %v108, %v107
    %v130 = vpack.c.b16 %v110, %v109
    %v131 = vpack.c.b16 %v112, %v111
    %v132 = vpack.c.b16 %v114, %v113
    %v133 = vpack.c.b16 %v116, %v115
    %v134 = vpack.c.b16 %v118, %v117
    %v135 = vpack.c.b16 %v120, %v119
    %v136 = vpack.c.b16 %v122, %v121
    %v137 = vpack.c.b16 %v124, %v123
    %v138 = vpack.c.b16 %v125, %v125
    %v143 = vunpack.c.l.b16 %v67
    %v144 = vunpack.c.h.b16 %v67
    %v145 = vunpack.c.l.b16 %v68
    %v146 = vunpack.c.h.b16 %v68
    %v147 = vunpack.c.l.b16 %v69
    %v148 = vunpack.c.h.b16 %v69
    %v149 = vunpack.c.l.b16 %v70
    %v150 = vunpack.c.h.b16 %v70
    %v151 = vpack.c.b16 %v145, %v143
    %v152 = vpack.c.b16 %v146, %v144
    %v153 = vpack.c.b16 %v149, %v147
    %v154 = vpack.c.b16 %v150, %v148
    %vm159 = vcmask 261120
    %v161 = vsel %vm159, %v126, 0
    %v164 = vsel %vm159, %v127, 0
    %v167 = vsel %vm159, %v128, 0
    %v170 = vsel %vm159, %v129, 0
    %v173 = vsel %vm159, %v130, 0
    %v176 = vsel %vm159, %v131, 0
    %v179 = vsel %vm159, %v132, 0
    %v182 = vsel %vm159, %v133, 0
    %v185 = vsel %vm159, %v134, 0
    %v188 = vsel %vm159, %v135, 0
    %v191 = vsel %vm159, %v136, 0
    %v194 = vsel %vm159, %v137, 0
    %v197 = vsel %vm159, %v138, 0
    %199 = vmatpush.bf16.msra.mxu0 0
    %200 = vmatpush.bf16.msra.mxu0 0
    %201 = vmatpush.bf16.msra.mxu0 0
    %202 = vmatpush.bf16.msra.mxu0 0
    %203 = vmatpush.bf16.msra.mxu0 0
    %204 = vmatpush.bf16.msra.mxu0 0
    %205 = vmatpush.bf16.msra.mxu0 %v153
    %206 = vmatpush.bf16.msra.mxu0 %v151
    %207 = vmatmul.bf16.gmra.mxu0 %v161
    %v208 = vpop.f32.mrf.mxu0
    %v209 = vadd.f32 %v72, %v208
    %v210 = vpop.f32.mrf.mxu0
    %v211 = vadd.f32 %v72, %v210
    %212 = vmatmul.bf16.gmra.mxu0 %v164
    %v213 = vpop.f32.mrf.mxu0
    %v214 = vadd.f32 %v72, %v213
    %v215 = vpop.f32.mrf.mxu0
    %v216 = vadd.f32 %v72, %v215
    %217 = vmatmul.bf16.gmra.mxu0 %v167
    %v218 = vpop.f32.mrf.mxu0
    %v219 = vadd.f32 %v72, %v218
    %v220 = vpop.f32.mrf.mxu0
    %v221 = vadd.f32 %v72, %v220
    %222 = vmatmul.bf16.gmra.mxu0 %v170
    %v223 = vpop.f32.mrf.mxu0
    %v224 = vadd.f32 %v72, %v223
    %v225 = vpop.f32.mrf.mxu0
    %v226 = vadd.f32 %v72, %v225
    %227 = vmatmul.bf16.gmra.mxu0 %v173
    %v228 = vpop.f32.mrf.mxu0
    %v229 = vadd.f32 %v72, %v228
    %v230 = vpop.f32.mrf.mxu0
    %v231 = vadd.f32 %v72, %v230
    %232 = vmatmul.bf16.gmra.mxu0 %v176
    %v233 = vpop.f32.mrf.mxu0
    %v234 = vadd.f32 %v72, %v233
    %v235 = vpop.f32.mrf.mxu0
    %v236 = vadd.f32 %v72, %v235
    %237 = vmatmul.bf16.gmra.mxu0 %v179
    %v238 = vpop.f32.mrf.mxu0
    %v239 = vadd.f32 %v72, %v238
    %v240 = vpop.f32.mrf.mxu0
    %v241 = vadd.f32 %v72, %v240
    %242 = vmatmul.bf16.gmra.mxu0 %v182
    %v243 = vpop.f32.mrf.mxu0
    %v244 = vadd.f32 %v72, %v243
    %v245 = vpop.f32.mrf.mxu0
    %v246 = vadd.f32 %v72, %v245
    %247 = vmatmul.bf16.gmra.mxu0 %v185
    %v248 = vpop.f32.mrf.mxu0
    %v249 = vadd.f32 %v72, %v248
    %v250 = vpop.f32.mrf.mxu0
    %v251 = vadd.f32 %v72, %v250
    %252 = vmatmul.bf16.gmra.mxu0 %v188
    %v253 = vpop.f32.mrf.mxu0
    %v254 = vadd.f32 %v72, %v253
    %v255 = vpop.f32.mrf.mxu0
    %v256 = vadd.f32 %v72, %v255
    %257 = vmatmul.bf16.gmra.mxu0 %v191
    %v258 = vpop.f32.mrf.mxu0
    %v259 = vadd.f32 %v72, %v258
    %v260 = vpop.f32.mrf.mxu0
    %v261 = vadd.f32 %v72, %v260
    %262 = vmatmul.bf16.gmra.mxu0 %v194
    %v263 = vpop.f32.mrf.mxu0
    %v264 = vadd.f32 %v72, %v263
    %v265 = vpop.f32.mrf.mxu0
    %v266 = vadd.f32 %v72, %v265
    %267 = vmatmul.bf16.gmra.mxu0 %v197
    %v268 = vpop.f32.mrf.mxu0
    %v269 = vadd.f32 %v72, %v268
    %v270 = vpop.f32.mrf.mxu0
    %271 = vdwg.mxu0
    %272 = vmatpush.bf16.msra.mxu0 0
    %273 = vmatpush.bf16.msra.mxu0 0
    %274 = vmatpush.bf16.msra.mxu0 0
    %275 = vmatpush.bf16.msra.mxu0 0
    %276 = vmatpush.bf16.msra.mxu0 0
    %277 = vmatpush.bf16.msra.mxu0 0
    %278 = vmatpush.bf16.msra.mxu0 %v154
    %279 = vmatpush.bf16.msra.mxu0 %v152
    %280 = vmatmul.bf16.gmra.mxu0 %v161
    %v281 = vpop.f32.mrf.mxu0
    %v282 = vadd.f32 %v73, %v281
    %v283 = vpop.f32.mrf.mxu0
    %v284 = vadd.f32 %v73, %v283
    %285 = vmatmul.bf16.gmra.mxu0 %v164
    %v286 = vpop.f32.mrf.mxu0
    %v287 = vadd.f32 %v73, %v286
    %v288 = vpop.f32.mrf.mxu0
    %v289 = vadd.f32 %v73, %v288
    %290 = vmatmul.bf16.gmra.mxu0 %v167
    %v291 = vpop.f32.mrf.mxu0
    %v292 = vadd.f32 %v73, %v291
    %v293 = vpop.f32.mrf.mxu0
    %v294 = vadd.f32 %v73, %v293
    %295 = vmatmul.bf16.gmra.mxu0 %v170
    %v296 = vpop.f32.mrf.mxu0
    %v297 = vadd.f32 %v73, %v296
    %v298 = vpop.f32.mrf.mxu0
    %v299 = vadd.f32 %v73, %v298
    %300 = vmatmul.bf16.gmra.mxu0 %v173
    %v301 = vpop.f32.mrf.mxu0
    %v302 = vadd.f32 %v73, %v301
    %v303 = vpop.f32.mrf.mxu0
    %v304 = vadd.f32 %v73, %v303
    %305 = vmatmul.bf16.gmra.mxu0 %v176
    %v306 = vpop.f32.mrf.mxu0
    %v307 = vadd.f32 %v73, %v306
    %v308 = vpop.f32.mrf.mxu0
    %v309 = vadd.f32 %v73, %v308
    %310 = vmatmul.bf16.gmra.mxu0 %v179
    %v311 = vpop.f32.mrf.mxu0
    %v312 = vadd.f32 %v73, %v311
    %v313 = vpop.f32.mrf.mxu0
    %v314 = vadd.f32 %v73, %v313
    %315 = vmatmul.bf16.gmra.mxu0 %v182
    %v316 = vpop.f32.mrf.mxu0
    %v317 = vadd.f32 %v73, %v316
    %v318 = vpop.f32.mrf.mxu0
    %v319 = vadd.f32 %v73, %v318
    %320 = vmatmul.bf16.gmra.mxu0 %v185
    %v321 = vpop.f32.mrf.mxu0
    %v322 = vadd.f32 %v73, %v321
    %v323 = vpop.f32.mrf.mxu0
    %v324 = vadd.f32 %v73, %v323
    %325 = vmatmul.bf16.gmra.mxu0 %v188
    %v326 = vpop.f32.mrf.mxu0
    %v327 = vadd.f32 %v73, %v326
    %v328 = vpop.f32.mrf.mxu0
    %v329 = vadd.f32 %v73, %v328
    %330 = vmatmul.bf16.gmra.mxu0 %v191
    %v331 = vpop.f32.mrf.mxu0
    %v332 = vadd.f32 %v73, %v331
    %v333 = vpop.f32.mrf.mxu0
    %v334 = vadd.f32 %v73, %v333
    %335 = vmatmul.bf16.gmra.mxu0 %v194
    %v336 = vpop.f32.mrf.mxu0
    %v337 = vadd.f32 %v73, %v336
    %v338 = vpop.f32.mrf.mxu0
    %v339 = vadd.f32 %v73, %v338
    %340 = vmatmul.bf16.gmra.mxu0 %v197
    %v341 = vpop.f32.mrf.mxu0
    %v342 = vadd.f32 %v73, %v341
    %v343 = vpop.f32.mrf.mxu0
    %344 = vdwg.mxu0
    %v345 = vmul.f32 %v209, %v209
    %v346 = vmul.f32 %v282, %v282
    %v347 = vmul.f32 %v211, %v211
    %v348 = vmul.f32 %v284, %v284
    %v349 = vmul.f32 %v214, %v214
    %v350 = vmul.f32 %v287, %v287
    %v351 = vmul.f32 %v216, %v216
    %v352 = vmul.f32 %v289, %v289
    %v353 = vmul.f32 %v219, %v219
    %v354 = vmul.f32 %v292, %v292
    %v355 = vmul.f32 %v221, %v221
    %v356 = vmul.f32 %v294, %v294
    %v357 = vmul.f32 %v224, %v224
    %v358 = vmul.f32 %v297, %v297
    %v359 = vmul.f32 %v226, %v226
    %v360 = vmul.f32 %v299, %v299
    %v361 = vmul.f32 %v229, %v229
    %v362 = vmul.f32 %v302, %v302
    %v363 = vmul.f32 %v231, %v231
    %v364 = vmul.f32 %v304, %v304
    %v365 = vmul.f32 %v234, %v234
    %v366 = vmul.f32 %v307, %v307
    %v367 = vmul.f32 %v236, %v236
    %v368 = vmul.f32 %v309, %v309
    %v369 = vmul.f32 %v239, %v239
    %v370 = vmul.f32 %v312, %v312
    %v371 = vmul.f32 %v241, %v241
    %v372 = vmul.f32 %v314, %v314
    %v373 = vmul.f32 %v244, %v244
    %v374 = vmul.f32 %v317, %v317
    %v375 = vmul.f32 %v246, %v246
    %v376 = vmul.f32 %v319, %v319
    %v377 = vmul.f32 %v249, %v249
    %v378 = vmul.f32 %v322, %v322
    %v379 = vmul.f32 %v251, %v251
    %v380 = vmul.f32 %v324, %v324
    %v381 = vmul.f32 %v254, %v254
    %v382 = vmul.f32 %v327, %v327
    %v383 = vmul.f32 %v256, %v256
    %v384 = vmul.f32 %v329, %v329
    %v385 = vmul.f32 %v259, %v259
    %v386 = vmul.f32 %v332, %v332
    %v387 = vmul.f32 %v261, %v261
    %v388 = vmul.f32 %v334, %v334
    %v389 = vmul.f32 %v264, %v264
    %v390 = vmul.f32 %v337, %v337
    %v391 = vmul.f32 %v266, %v266
    %v392 = vmul.f32 %v339, %v339
    %v393 = vmul.f32 %v269, %v269
    %v394 = vmul.f32 %v342, %v342
    %v395 = vmul.f32 %v209, %v345
    %v396 = vmul.f32 %v282, %v346
    %v397 = vmul.f32 %v211, %v347
    %v398 = vmul.f32 %v284, %v348
    %v399 = vmul.f32 %v214, %v349
    %v400 = vmul.f32 %v287, %v350
    %v401 = vmul.f32 %v216, %v351
    %v402 = vmul.f32 %v289, %v352
    %v403 = vmul.f32 %v219, %v353
    %v404 = vmul.f32 %v292, %v354
    %v405 = vmul.f32 %v221, %v355
    %v406 = vmul.f32 %v294, %v356
    %v407 = vmul.f32 %v224, %v357
    %v408 = vmul.f32 %v297, %v358
    %v409 = vmul.f32 %v226, %v359
    %v410 = vmul.f32 %v299, %v360
    %v411 = vmul.f32 %v229, %v361
    %v412 = vmul.f32 %v302, %v362
    %v413 = vmul.f32 %v231, %v363
    %v414 = vmul.f32 %v304, %v364
    %v415 = vmul.f32 %v234, %v365
    %v416 = vmul.f32 %v307, %v366
    %v417 = vmul.f32 %v236, %v367
    %v418 = vmul.f32 %v309, %v368
    %v419 = vmul.f32 %v239, %v369
    %v420 = vmul.f32 %v312, %v370
    %v421 = vmul.f32 %v241, %v371
    %v422 = vmul.f32 %v314, %v372
    %v423 = vmul.f32 %v244, %v373
    %v424 = vmul.f32 %v317, %v374
    %v425 = vmul.f32 %v246, %v375
    %v426 = vmul.f32 %v319, %v376
    %v427 = vmul.f32 %v249, %v377
    %v428 = vmul.f32 %v322, %v378
    %v429 = vmul.f32 %v251, %v379
    %v430 = vmul.f32 %v324, %v380
    %v431 = vmul.f32 %v254, %v381
    %v432 = vmul.f32 %v327, %v382
    %v433 = vmul.f32 %v256, %v383
    %v434 = vmul.f32 %v329, %v384
    %v435 = vmul.f32 %v259, %v385
    %v436 = vmul.f32 %v332, %v386
    %v437 = vmul.f32 %v261, %v387
    %v438 = vmul.f32 %v334, %v388
    %v439 = vmul.f32 %v264, %v389
    %v440 = vmul.f32 %v337, %v390
    %v441 = vmul.f32 %v266, %v391
    %v442 = vmul.f32 %v339, %v392
    %v443 = vmul.f32 %v269, %v393
    %v444 = vmul.f32 %v342, %v394
    %v445 = vmul.f32 %v395, 0.044715
    %v446 = vmul.f32 %v396, 0.044715
    %v447 = vmul.f32 %v397, 0.044715
    %v448 = vmul.f32 %v398, 0.044715
    %v449 = vmul.f32 %v399, 0.044715
    %v450 = vmul.f32 %v400, 0.044715
    %v451 = vmul.f32 %v401, 0.044715
    %v452 = vmul.f32 %v402, 0.044715
    %v453 = vmul.f32 %v403, 0.044715
    %v454 = vmul.f32 %v404, 0.044715
    %v455 = vmul.f32 %v405, 0.044715
    %v456 = vmul.f32 %v406, 0.044715
    %v457 = vmul.f32 %v407, 0.044715
    %v458 = vmul.f32 %v408, 0.044715
    %v459 = vmul.f32 %v409, 0.044715
    %v460 = vmul.f32 %v410, 0.044715
    %v461 = vmul.f32 %v411, 0.044715
    %v462 = vmul.f32 %v412, 0.044715
    %v463 = vmul.f32 %v413, 0.044715
    %v464 = vmul.f32 %v414, 0.044715
    %v465 = vmul.f32 %v415, 0.044715
    %v466 = vmul.f32 %v416, 0.044715
    %v467 = vmul.f32 %v417, 0.044715
    %v468 = vmul.f32 %v418, 0.044715
    %v469 = vmul.f32 %v419, 0.044715
    %v470 = vmul.f32 %v420, 0.044715
    %v471 = vmul.f32 %v421, 0.044715
    %v472 = vmul.f32 %v422, 0.044715
    %v473 = vmul.f32 %v423, 0.044715
    %v474 = vmul.f32 %v424, 0.044715
    %v475 = vmul.f32 %v425, 0.044715
    %v476 = vmul.f32 %v426, 0.044715
    %v477 = vmul.f32 %v427, 0.044715
    %v478 = vmul.f32 %v428, 0.044715
    %v479 = vmul.f32 %v429, 0.044715
    %v480 = vmul.f32 %v430, 0.044715
    %v481 = vmul.f32 %v431, 0.044715
    %v482 = vmul.f32 %v432, 0.044715
    %v483 = vmul.f32 %v433, 0.044715
    %v484 = vmul.f32 %v434, 0.044715
    %v485 = vmul.f32 %v435, 0.044715
    %v486 = vmul.f32 %v436, 0.044715
    %v487 = vmul.f32 %v437, 0.044715
    %v488 = vmul.f32 %v438, 0.044715
    %v489 = vmul.f32 %v439, 0.044715
    %v490 = vmul.f32 %v440, 0.044715
    %v491 = vmul.f32 %v441, 0.044715
    %v492 = vmul.f32 %v442, 0.044715
    %v493 = vmul.f32 %v443, 0.044715
    %v494 = vmul.f32 %v444, 0.044715
    %v495 = vadd.f32 %v209, %v445
    %v496 = vadd.f32 %v282, %v446
    %v497 = vadd.f32 %v211, %v447
    %v498 = vadd.f32 %v284, %v448
    %v499 = vadd.f32 %v214, %v449
    %v500 = vadd.f32 %v287, %v450
    %v501 = vadd.f32 %v216, %v451
    %v502 = vadd.f32 %v289, %v452
    %v503 = vadd.f32 %v219, %v453
    %v504 = vadd.f32 %v292, %v454
    %v505 = vadd.f32 %v221, %v455
    %v506 = vadd.f32 %v294, %v456
    %v507 = vadd.f32 %v224, %v457
    %v508 = vadd.f32 %v297, %v458
    %v509 = vadd.f32 %v226, %v459
    %v510 = vadd.f32 %v299, %v460
    %v511 = vadd.f32 %v229, %v461
    %v512 = vadd.f32 %v302, %v462
    %v513 = vadd.f32 %v231, %v463
    %v514 = vadd.f32 %v304, %v464
    %v515 = vadd.f32 %v234, %v465
    %v516 = vadd.f32 %v307, %v466
    %v517 = vadd.f32 %v236, %v467
    %v518 = vadd.f32 %v309, %v468
    %v519 = vadd.f32 %v239, %v469
    %v520 = vadd.f32 %v312, %v470
    %v521 = vadd.f32 %v241, %v471
    %v522 = vadd.f32 %v314, %v472
    %v523 = vadd.f32 %v244, %v473
    %v524 = vadd.f32 %v317, %v474
    %v525 = vadd.f32 %v246, %v475
    %v526 = vadd.f32 %v319, %v476
    %v527 = vadd.f32 %v249, %v477
    %v528 = vadd.f32 %v322, %v478
    %v529 = vadd.f32 %v251, %v479
    %v530 = vadd.f32 %v324, %v480
    %v531 = vadd.f32 %v254, %v481
    %v532 = vadd.f32 %v327, %v482
    %v533 = vadd.f32 %v256, %v483
    %v534 = vadd.f32 %v329, %v484
    %v535 = vadd.f32 %v259, %v485
    %v536 = vadd.f32 %v332, %v486
    %v537 = vadd.f32 %v261, %v487
    %v538 = vadd.f32 %v334, %v488
    %v539 = vadd.f32 %v264, %v489
    %v540 = vadd.f32 %v337, %v490
    %v541 = vadd.f32 %v266, %v491
    %v542 = vadd.f32 %v339, %v492
    %v543 = vadd.f32 %v269, %v493
    %v544 = vadd.f32 %v342, %v494
    %v545 = vmul.f32 %v495, 0.7978846
    %v546 = vmul.f32 %v496, 0.7978846
    %v547 = vmul.f32 %v497, 0.7978846
    %v548 = vmul.f32 %v498, 0.7978846
    %v549 = vmul.f32 %v499, 0.7978846
    %v550 = vmul.f32 %v500, 0.7978846
    %v551 = vmul.f32 %v501, 0.7978846
    %v552 = vmul.f32 %v502, 0.7978846
    %v553 = vmul.f32 %v503, 0.7978846
    %v554 = vmul.f32 %v504, 0.7978846
    %v555 = vmul.f32 %v505, 0.7978846
    %v556 = vmul.f32 %v506, 0.7978846
    %v557 = vmul.f32 %v507, 0.7978846
    %v558 = vmul.f32 %v508, 0.7978846
    %v559 = vmul.f32 %v509, 0.7978846
    %v560 = vmul.f32 %v510, 0.7978846
    %v561 = vmul.f32 %v511, 0.7978846
    %v562 = vmul.f32 %v512, 0.7978846
    %v563 = vmul.f32 %v513, 0.7978846
    %v564 = vmul.f32 %v514, 0.7978846
    %v565 = vmul.f32 %v515, 0.7978846
    %v566 = vmul.f32 %v516, 0.7978846
    %v567 = vmul.f32 %v517, 0.7978846
    %v568 = vmul.f32 %v518, 0.7978846
    %v569 = vmul.f32 %v519, 0.7978846
    %v570 = vmul.f32 %v520, 0.7978846
    %v571 = vmul.f32 %v521, 0.7978846
    %v572 = vmul.f32 %v522, 0.7978846
    %v573 = vmul.f32 %v523, 0.7978846
    %v574 = vmul.f32 %v524, 0.7978846
    %v575 = vmul.f32 %v525, 0.7978846
    %v576 = vmul.f32 %v526, 0.7978846
    %v577 = vmul.f32 %v527, 0.7978846
    %v578 = vmul.f32 %v528, 0.7978846
    %v579 = vmul.f32 %v529, 0.7978846
    %v580 = vmul.f32 %v530, 0.7978846
    %v581 = vmul.f32 %v531, 0.7978846
    %v582 = vmul.f32 %v532, 0.7978846
    %v583 = vmul.f32 %v533, 0.7978846
    %v584 = vmul.f32 %v534, 0.7978846
    %v585 = vmul.f32 %v535, 0.7978846
    %v586 = vmul.f32 %v536, 0.7978846
    %v587 = vmul.f32 %v537, 0.7978846
    %v588 = vmul.f32 %v538, 0.7978846
    %v589 = vmul.f32 %v539, 0.7978846
    %v590 = vmul.f32 %v540, 0.7978846
    %v591 = vmul.f32 %v541, 0.7978846
    %v592 = vmul.f32 %v542, 0.7978846
    %v593 = vmul.f32 %v543, 0.7978846
    %v594 = vmul.f32 %v544, 0.7978846
    %v595 = vtanh.pop %v545
    %v596 = vtanh.pop %v546
    %v597 = vtanh.pop %v547
    %v598 = vtanh.pop %v548
    %v599 = vtanh.pop %v549
    %v600 = vtanh.pop %v550
    %v601 = vtanh.pop %v551
    %v602 = vtanh.pop %v552
    %v603 = vtanh.pop %v553
    %v604 = vtanh.pop %v554
    %v605 = vtanh.pop %v555
    %v606 = vtanh.pop %v556
    %v607 = vtanh.pop %v557
    %v608 = vtanh.pop %v558
    %v609 = vtanh.pop %v559
    %v610 = vtanh.pop %v560
    %v611 = vtanh.pop %v561
    %v612 = vtanh.pop %v562
    %v613 = vtanh.pop %v563
    %v614 = vtanh.pop %v564
    %v615 = vtanh.pop %v565
    %v616 = vtanh.pop %v566
    %v617 = vtanh.pop %v567
    %v618 = vtanh.pop %v568
    %v619 = vtanh.pop %v569
    %v620 = vtanh.pop %v570
    %v621 = vtanh.pop %v571
    %v622 = vtanh.pop %v572
    %v623 = vtanh.pop %v573
    %v624 = vtanh.pop %v574
    %v625 = vtanh.pop %v575
    %v626 = vtanh.pop %v576
    %v627 = vtanh.pop %v577
    %v628 = vtanh.pop %v578
    %v629 = vtanh.pop %v579
    %v630 = vtanh.pop %v580
    %v631 = vtanh.pop %v581
    %v632 = vtanh.pop %v582
    %v633 = vtanh.pop %v583
    %v634 = vtanh.pop %v584
    %v635 = vtanh.pop %v585
    %v636 = vtanh.pop %v586
    %v637 = vtanh.pop %v587
    %v638 = vtanh.pop %v588
    %v639 = vtanh.pop %v589
    %v640 = vtanh.pop %v590
    %v641 = vtanh.pop %v591
    %v642 = vtanh.pop %v592
    %v643 = vtanh.pop %v593
    %v644 = vtanh.pop %v594
    %v645 = vadd.f32 %v595, 1.0
    %v646 = vadd.f32 %v596, 1.0
    %v647 = vadd.f32 %v597, 1.0
    %v648 = vadd.f32 %v598, 1.0
    %v649 = vadd.f32 %v599, 1.0
    %v650 = vadd.f32 %v600, 1.0
    %v651 = vadd.f32 %v601, 1.0
    %v652 = vadd.f32 %v602, 1.0
    %v653 = vadd.f32 %v603, 1.0
    %v654 = vadd.f32 %v604, 1.0
    %v655 = vadd.f32 %v605, 1.0
    %v656 = vadd.f32 %v606, 1.0
    %v657 = vadd.f32 %v607, 1.0
    %v658 = vadd.f32 %v608, 1.0
    %v659 = vadd.f32 %v609, 1.0
    %v660 = vadd.f32 %v610, 1.0
    %v661 = vadd.f32 %v611, 1.0
    %v662 = vadd.f32 %v612, 1.0
    %v663 = vadd.f32 %v613, 1.0
    %v664 = vadd.f32 %v614, 1.0
    %v665 = vadd.f32 %v615, 1.0
    %v666 = vadd.f32 %v616, 1.0
    %v667 = vadd.f32 %v617, 1.0
    %v668 = vadd.f32 %v618, 1.0
    %v669 = vadd.f32 %v619, 1.0
    %v670 = vadd.f32 %v620, 1.0
    %v671 = vadd.f32 %v621, 1.0
    %v672 = vadd.f32 %v622, 1.0
    %v673 = vadd.f32 %v623, 1.0
    %v674 = vadd.f32 %v624, 1.0
    %v675 = vadd.f32 %v625, 1.0
    %v676 = vadd.f32 %v626, 1.0
    %v677 = vadd.f32 %v627, 1.0
    %v678 = vadd.f32 %v628, 1.0
    %v679 = vadd.f32 %v629, 1.0
    %v680 = vadd.f32 %v630, 1.0
    %v681 = vadd.f32 %v631, 1.0
    %v682 = vadd.f32 %v632, 1.0
    %v683 = vadd.f32 %v633, 1.0
    %v684 = vadd.f32 %v634, 1.0
    %v685 = vadd.f32 %v635, 1.0
    %v686 = vadd.f32 %v636, 1.0
    %v687 = vadd.f32 %v637, 1.0
    %v688 = vadd.f32 %v638, 1.0
    %v689 = vadd.f32 %v639, 1.0
    %v690 = vadd.f32 %v640, 1.0
    %v691 = vadd.f32 %v641, 1.0
    %v692 = vadd.f32 %v642, 1.0
    %v693 = vadd.f32 %v643, 1.0
    %v694 = vadd.f32 %v644, 1.0
    %v695 = vmul.f32 %v645, 0.5
    %v696 = vmul.f32 %v646, 0.5
    %v697 = vmul.f32 %v647, 0.5
    %v698 = vmul.f32 %v648, 0.5
    %v699 = vmul.f32 %v649, 0.5
    %v700 = vmul.f32 %v650, 0.5
    %v701 = vmul.f32 %v651, 0.5
    %v702 = vmul.f32 %v652, 0.5
    %v703 = vmul.f32 %v653, 0.5
    %v704 = vmul.f32 %v654, 0.5
    %v705 = vmul.f32 %v655, 0.5
    %v706 = vmul.f32 %v656, 0.5
    %v707 = vmul.f32 %v657, 0.5
    %v708 = vmul.f32 %v658, 0.5
    %v709 = vmul.f32 %v659, 0.5
    %v710 = vmul.f32 %v660, 0.5
    %v711 = vmul.f32 %v661, 0.5
    %v712 = vmul.f32 %v662, 0.5
    %v713 = vmul.f32 %v663, 0.5
    %v714 = vmul.f32 %v664, 0.5
    %v715 = vmul.f32 %v665, 0.5
    %v716 = vmul.f32 %v666, 0.5
    %v717 = vmul.f32 %v667, 0.5
    %v718 = vmul.f32 %v668, 0.5
    %v719 = vmul.f32 %v669, 0.5
    %v720 = vmul.f32 %v670, 0.5
    %v721 = vmul.f32 %v671, 0.5
    %v722 = vmul.f32 %v672, 0.5
    %v723 = vmul.f32 %v673, 0.5
    %v724 = vmul.f32 %v674, 0.5
    %v725 = vmul.f32 %v675, 0.5
    %v726 = vmul.f32 %v676, 0.5
    %v727 = vmul.f32 %v677, 0.5
    %v728 = vmul.f32 %v678, 0.5
    %v729 = vmul.f32 %v679, 0.5
    %v730 = vmul.f32 %v680, 0.5
    %v731 = vmul.f32 %v681, 0.5
    %v732 = vmul.f32 %v682, 0.5
    %v733 = vmul.f32 %v683, 0.5
    %v734 = vmul.f32 %v684, 0.5
    %v735 = vmul.f32 %v685, 0.5
    %v736 = vmul.f32 %v686, 0.5
    %v737 = vmul.f32 %v687, 0.5
    %v738 = vmul.f32 %v688, 0.5
    %v739 = vmul.f32 %v689, 0.5
    %v740 = vmul.f32 %v690, 0.5
    %v741 = vmul.f32 %v691, 0.5
    %v742 = vmul.f32 %v692, 0.5
    %v743 = vmul.f32 %v693, 0.5
    %v744 = vmul.f32 %v694, 0.5
    %v745 = vmul.f32 %v209, %v695
    %v746 = vmul.f32 %v282, %v696
    %v747 = vmul.f32 %v211, %v697
    %v748 = vmul.f32 %v284, %v698
    %v749 = vmul.f32 %v214, %v699
    %v750 = vmul.f32 %v287, %v700
    %v751 = vmul.f32 %v216, %v701
    %v752 = vmul.f32 %v289, %v702
    %v753 = vmul.f32 %v219, %v703
    %v754 = vmul.f32 %v292, %v704
    %v755 = vmul.f32 %v221, %v705
    %v756 = vmul.f32 %v294, %v706
    %v757 = vmul.f32 %v224, %v707
    %v758 = vmul.f32 %v297, %v708
    %v759 = vmul.f32 %v226, %v709
    %v760 = vmul.f32 %v299, %v710
    %v761 = vmul.f32 %v229, %v711
    %v762 = vmul.f32 %v302, %v712
    %v763 = vmul.f32 %v231, %v713
    %v764 = vmul.f32 %v304, %v714
    %v765 = vmul.f32 %v234, %v715
    %v766 = vmul.f32 %v307, %v716
    %v767 = vmul.f32 %v236, %v717
    %v768 = vmul.f32 %v309, %v718
    %v769 = vmul.f32 %v239, %v719
    %v770 = vmul.f32 %v312, %v720
    %v771 = vmul.f32 %v241, %v721
    %v772 = vmul.f32 %v314, %v722
    %v773 = vmul.f32 %v244, %v723
    %v774 = vmul.f32 %v317, %v724
    %v775 = vmul.f32 %v246, %v725
    %v776 = vmul.f32 %v319, %v726
    %v777 = vmul.f32 %v249, %v727
    %v778 = vmul.f32 %v322, %v728
    %v779 = vmul.f32 %v251, %v729
    %v780 = vmul.f32 %v324, %v730
    %v781 = vmul.f32 %v254, %v731
    %v782 = vmul.f32 %v327, %v732
    %v783 = vmul.f32 %v256, %v733
    %v784 = vmul.f32 %v329, %v734
    %v785 = vmul.f32 %v259, %v735
    %v786 = vmul.f32 %v332, %v736
    %v787 = vmul.f32 %v261, %v737
    %v788 = vmul.f32 %v334, %v738
    %v789 = vmul.f32 %v264, %v739
    %v790 = vmul.f32 %v337, %v740
    %v791 = vmul.f32 %v266, %v741
    %v792 = vmul.f32 %v339, %v742
    %v793 = vmul.f32 %v269, %v743
    %v794 = vmul.f32 %v342, %v744
    %v795 = vpack.c.bf16 %v747, %v745
    %v796 = vpack.c.bf16 %v748, %v746
    %v797 = vpack.c.bf16 %v751, %v749
    %v798 = vpack.c.bf16 %v752, %v750
    %v799 = vpack.c.bf16 %v755, %v753
    %v800 = vpack.c.bf16 %v756, %v754
    %v801 = vpack.c.bf16 %v759, %v757
    %v802 = vpack.c.bf16 %v760, %v758
    %v803 = vpack.c.bf16 %v763, %v761
    %v804 = vpack.c.bf16 %v764, %v762
    %v805 = vpack.c.bf16 %v767, %v765
    %v806 = vpack.c.bf16 %v768, %v766
    %v807 = vpack.c.bf16 %v771, %v769
    %v808 = vpack.c.bf16 %v772, %v770
    %v809 = vpack.c.bf16 %v775, %v773
    %v810 = vpack.c.bf16 %v776, %v774
    %v811 = vpack.c.bf16 %v779, %v777
    %v812 = vpack.c.bf16 %v780, %v778
    %v813 = vpack.c.bf16 %v783, %v781
    %v814 = vpack.c.bf16 %v784, %v782
    %v815 = vpack.c.bf16 %v787, %v785
    %v816 = vpack.c.bf16 %v788, %v786
    %v817 = vpack.c.bf16 %v791, %v789
    %v818 = vpack.c.bf16 %v792, %v790
    %v819 = vpack.c.bf16 %v793, %v793
    %v820 = vpack.c.bf16 %v794, %v794
    %v821 = vld [vmem:[#allocation2] sm:$0xff]
    %v822 = vld [vmem:[#allocation2 + $0x8] sm:$0xff]
    %v823 = vld [vmem:[#allocation2 + $0x10] sm:$0xff]
    %v824 = vld [vmem:[#allocation2 + $0x18] sm:$0xff]
    %v825 = vld [vmem:[#allocation2 + $0x20] sm:$0xff]
    %v826 = vld [vmem:[#allocation2 + $0x28] sm:$0xff]
    %v827 = vld [vmem:[#allocation2 + $0x30] sm:$0xff]
    %v828 = vld [vmem:[#allocation2 + $0x38] sm:$0xff]
    %v829 = vld [vmem:[#allocation2 + $0x40] sm:$0xff]
    %v830 = vld [vmem:[#allocation2 + $0x48] sm:$0xff]
    %v831 = vld [vmem:[#allocation2 + $0x50] sm:$0xff]
    %v832 = vld [vmem:[#allocation2 + $0x58] sm:$0xff]
    %v833 = vld [vmem:[#allocation2 + $0x60] sm:$0xff]
    %v834 = vld [vmem:[#allocation2 + $0x68] sm:$0xff]
    %v835 = vld [vmem:[#allocation2 + $0x70] sm:$0xff]
    %v836 = vld [vmem:[#allocation2 + $0x78] sm:$0xff]
    %v837 = vld [vmem:[#allocation2 + $0x80] sm:$0xff]
    %v838 = vld [vmem:[#allocation2 + $0x88] sm:$0xff]
    %v839 = vld [vmem:[#allocation2 + $0x90] sm:$0xff]
    %v840 = vld [vmem:[#allocation2 + $0x98] sm:$0xff]
    %v841 = vld [vmem:[#allocation2 + $0xa0] sm:$0xff]
    %v842 = vld [vmem:[#allocation2 + $0xa8] sm:$0xff]
    %v843 = vld [vmem:[#allocation2 + $0xb0] sm:$0xff]
    %v844 = vld [vmem:[#allocation2 + $0xb8] sm:$0xff]
    %v845 = vld [vmem:[#allocation2 + $0xc0] sm:$0xff]
    %v846 = vld [vmem:[#allocation2 + $0xc8] sm:$0xff]
    %v847 = vld [vmem:[#allocation2 + $0xd0] sm:$0xff]
    %v848 = vld [vmem:[#allocation2 + $0xd8] sm:$0xff]
    %v849 = vld [vmem:[#allocation2 + $0xe0] sm:$0xff]
    %v850 = vld [vmem:[#allocation2 + $0xe8] sm:$0xff]
    %v851 = vld [vmem:[#allocation2 + $0xf0] sm:$0xff]
    %v852 = vld [vmem:[#allocation2 + $0xf8] sm:$0xff]
    %v854 = vperm.slane %v37, 0
    %v855 = vperm.slane %v37, 1
    %v890 = vunpack.c.l.b16 %v821
    %v891 = vunpack.c.h.b16 %v821
    %v892 = vunpack.c.l.b16 %v822
    %v893 = vunpack.c.h.b16 %v822
    %v894 = vunpack.c.l.b16 %v823
    %v895 = vunpack.c.h.b16 %v823
    %v896 = vunpack.c.l.b16 %v824
    %v897 = vunpack.c.h.b16 %v824
    %v898 = vunpack.c.l.b16 %v825
    %v899 = vunpack.c.h.b16 %v825
    %v900 = vunpack.c.l.b16 %v826
    %v901 = vunpack.c.h.b16 %v826
    %v902 = vunpack.c.l.b16 %v827
    %v903 = vunpack.c.h.b16 %v827
    %v904 = vunpack.c.l.b16 %v828
    %v905 = vunpack.c.h.b16 %v828
    %v906 = vunpack.c.l.b16 %v829
    %v907 = vunpack.c.h.b16 %v829
    %v908 = vunpack.c.l.b16 %v830
    %v909 = vunpack.c.h.b16 %v830
    %v910 = vunpack.c.l.b16 %v831
    %v911 = vunpack.c.h.b16 %v831
    %v912 = vunpack.c.l.b16 %v832
    %v913 = vunpack.c.h.b16 %v832
    %v914 = vunpack.c.l.b16 %v833
    %v915 = vunpack.c.h.b16 %v833
    %v916 = vunpack.c.l.b16 %v834
    %v917 = vunpack.c.h.b16 %v834
    %v918 = vunpack.c.l.b16 %v835
    %v919 = vunpack.c.h.b16 %v835
    %v920 = vunpack.c.l.b16 %v836
    %v921 = vunpack.c.h.b16 %v836
    %v922 = vunpack.c.l.b16 %v837
    %v923 = vunpack.c.h.b16 %v837
    %v924 = vunpack.c.l.b16 %v838
    %v925 = vunpack.c.h.b16 %v838
    %v926 = vunpack.c.l.b16 %v839
    %v927 = vunpack.c.h.b16 %v839
    %v928 = vunpack.c.l.b16 %v840
    %v929 = vunpack.c.h.b16 %v840
    %v930 = vunpack.c.l.b16 %v841
    %v931 = vunpack.c.h.b16 %v841
    %v932 = vunpack.c.l.b16 %v842
    %v933 = vunpack.c.h.b16 %v842
    %v934 = vunpack.c.l.b16 %v843
    %v935 = vunpack.c.h.b16 %v843
    %v936 = vunpack.c.l.b16 %v844
    %v937 = vunpack.c.h.b16 %v844
    %v938 = vunpack.c.l.b16 %v845
    %v939 = vunpack.c.h.b16 %v845
    %v940 = vunpack.c.l.b16 %v846
    %v941 = vunpack.c.h.b16 %v846
    %v942 = vunpack.c.l.b16 %v847
    %v943 = vunpack.c.h.b16 %v847
    %v944 = vunpack.c.l.b16 %v848
    %v945 = vunpack.c.h.b16 %v848
    %v946 = vunpack.c.l.b16 %v849
    %v947 = vunpack.c.h.b16 %v849
    %v948 = vunpack.c.l.b16 %v850
    %v949 = vunpack.c.h.b16 %v850
    %v950 = vunpack.c.l.b16 %v851
    %v951 = vunpack.c.h.b16 %v851
    %v952 = vunpack.c.l.b16 %v852
    %v953 = vunpack.c.h.b16 %v852
    %v954 = vpack.c.b16 %v892, %v890
    %v955 = vpack.c.b16 %v893, %v891
    %v956 = vpack.c.b16 %v896, %v894
    %v957 = vpack.c.b16 %v897, %v895
    %v958 = vpack.c.b16 %v900, %v898
    %v959 = vpack.c.b16 %v901, %v899
    %v960 = vpack.c.b16 %v904, %v902
    %v961 = vpack.c.b16 %v905, %v903
    %v962 = vpack.c.b16 %v908, %v906
    %v963 = vpack.c.b16 %v909, %v907
    %v964 = vpack.c.b16 %v912, %v910
    %v965 = vpack.c.b16 %v913, %v911
    %v966 = vpack.c.b16 %v916, %v914
    %v967 = vpack.c.b16 %v917, %v915
    %v968 = vpack.c.b16 %v920, %v918
    %v969 = vpack.c.b16 %v921, %v919
    %v970 = vpack.c.b16 %v924, %v922
    %v971 = vpack.c.b16 %v925, %v923
    %v972 = vpack.c.b16 %v928, %v926
    %v973 = vpack.c.b16 %v929, %v927
    %v974 = vpack.c.b16 %v932, %v930
    %v975 = vpack.c.b16 %v933, %v931
    %v976 = vpack.c.b16 %v936, %v934
    %v977 = vpack.c.b16 %v937, %v935
    %v978 = vpack.c.b16 %v940, %v938
    %v979 = vpack.c.b16 %v941, %v939
    %v980 = vpack.c.b16 %v944, %v942
    %v981 = vpack.c.b16 %v945, %v943
    %v982 = vpack.c.b16 %v948, %v946
    %v983 = vpack.c.b16 %v949, %v947
    %v984 = vpack.c.b16 %v952, %v950
    %v985 = vpack.c.b16 %v953, %v951
    %1018 = vmatpush.bf16.msra.mxu0 %v968
    %1019 = vmatpush.bf16.msra.mxu0 %v966
    %1020 = vmatpush.bf16.msra.mxu0 %v964
    %1021 = vmatpush.bf16.msra.mxu0 %v962
    %1022 = vmatpush.bf16.msra.mxu0 %v960
    %1023 = vmatpush.bf16.msra.mxu0 %v958
    %1024 = vmatpush.bf16.msra.mxu0 %v956
    %1025 = vmatpush.bf16.msra.mxu0 %v954
    %1026 = vmatmul.bf16.gmra.mxu0 %v795
    %v1027 = vpop.f32.mrf.mxu0
    %v1028 = vadd.f32 %v854, %v1027
    %v1029 = vpop.f32.mrf.mxu0
    %v1030 = vadd.f32 %v854, %v1029
    %1031 = vmatmul.bf16.gmra.mxu0 %v797
    %v1032 = vpop.f32.mrf.mxu0
    %v1033 = vadd.f32 %v854, %v1032
    %v1034 = vpop.f32.mrf.mxu0
    %v1035 = vadd.f32 %v854, %v1034
    %1036 = vmatmul.bf16.gmra.mxu0 %v799
    %v1037 = vpop.f32.mrf.mxu0
    %v1038 = vadd.f32 %v854, %v1037
    %v1039 = vpop.f32.mrf.mxu0
    %v1040 = vadd.f32 %v854, %v1039
    %1041 = vmatmul.bf16.gmra.mxu0 %v801
    %v1042 = vpop.f32.mrf.mxu0
    %v1043 = vadd.f32 %v854, %v1042
    %v1044 = vpop.f32.mrf.mxu0
    %v1045 = vadd.f32 %v854, %v1044
    %1046 = vmatmul.bf16.gmra.mxu0 %v803
    %v1047 = vpop.f32.mrf.mxu0
    %v1048 = vadd.f32 %v854, %v1047
    %v1049 = vpop.f32.mrf.mxu0
    %v1050 = vadd.f32 %v854, %v1049
    %1051 = vmatmul.bf16.gmra.mxu0 %v805
    %v1052 = vpop.f32.mrf.mxu0
    %v1053 = vadd.f32 %v854, %v1052
    %v1054 = vpop.f32.mrf.mxu0
    %v1055 = vadd.f32 %v854, %v1054
    %1056 = vmatmul.bf16.gmra.mxu0 %v807
    %v1057 = vpop.f32.mrf.mxu0
    %v1058 = vadd.f32 %v854, %v1057
    %v1059 = vpop.f32.mrf.mxu0
    %v1060 = vadd.f32 %v854, %v1059
    %1061 = vmatmul.bf16.gmra.mxu0 %v809
    %v1062 = vpop.f32.mrf.mxu0
    %v1063 = vadd.f32 %v854, %v1062
    %v1064 = vpop.f32.mrf.mxu0
    %v1065 = vadd.f32 %v854, %v1064
    %1066 = vmatmul.bf16.gmra.mxu0 %v811
    %v1067 = vpop.f32.mrf.mxu0
    %v1068 = vadd.f32 %v854, %v1067
    %v1069 = vpop.f32.mrf.mxu0
    %v1070 = vadd.f32 %v854, %v1069
    %1071 = vmatmul.bf16.gmra.mxu0 %v813
    %v1072 = vpop.f32.mrf.mxu0
    %v1073 = vadd.f32 %v854, %v1072
    %v1074 = vpop.f32.mrf.mxu0
    %v1075 = vadd.f32 %v854, %v1074
    %1076 = vmatmul.bf16.gmra.mxu0 %v815
    %v1077 = vpop.f32.mrf.mxu0
    %v1078 = vadd.f32 %v854, %v1077
    %v1079 = vpop.f32.mrf.mxu0
    %v1080 = vadd.f32 %v854, %v1079
    %1081 = vmatmul.bf16.gmra.mxu0 %v817
    %v1082 = vpop.f32.mrf.mxu0
    %v1083 = vadd.f32 %v854, %v1082
    %v1084 = vpop.f32.mrf.mxu0
    %v1085 = vadd.f32 %v854, %v1084
    %1086 = vmatmul.bf16.gmra.mxu0 %v819
    %v1087 = vpop.f32.mrf.mxu0
    %v1088 = vadd.f32 %v854, %v1087
    %v1089 = vpop.f32.mrf.mxu0
    %1090 = vdwg.mxu0
    %1091 = vmatpush.bf16.msra.mxu0 %v984
    %1092 = vmatpush.bf16.msra.mxu0 %v982
    %1093 = vmatpush.bf16.msra.mxu0 %v980
    %1094 = vmatpush.bf16.msra.mxu0 %v978
    %1095 = vmatpush.bf16.msra.mxu0 %v976
    %1096 = vmatpush.bf16.msra.mxu0 %v974
    %1097 = vmatpush.bf16.msra.mxu0 %v972
    %1098 = vmatpush.bf16.msra.mxu0 %v970
    %1099 = vmatmul.bf16.gmra.mxu0 %v796
    %v1100 = vpop.f32.mrf.mxu0
    %v1101 = vadd.f32 %v1028, %v1100
    %v1102 = vpop.f32.mrf.mxu0
    %v1103 = vadd.f32 %v1030, %v1102
    %1104 = vmatmul.bf16.gmra.mxu0 %v798
    %v1105 = vpop.f32.mrf.mxu0
    %v1106 = vadd.f32 %v1033, %v1105
    %v1107 = vpop.f32.mrf.mxu0
    %v1108 = vadd.f32 %v1035, %v1107
    %1109 = vmatmul.bf16.gmra.mxu0 %v800
    %v1110 = vpop.f32.mrf.mxu0
    %v1111 = vadd.f32 %v1038, %v1110
    %v1112 = vpop.f32.mrf.mxu0
    %v1113 = vadd.f32 %v1040, %v1112
    %1114 = vmatmul.bf16.gmra.mxu0 %v802
    %v1115 = vpop.f32.mrf.mxu0
    %v1116 = vadd.f32 %v1043, %v1115
    %v1117 = vpop.f32.mrf.mxu0
    %v1118 = vadd.f32 %v1045, %v1117
    %1119 = vmatmul.bf16.gmra.mxu0 %v804
    %v1120 = vpop.f32.mrf.mxu0
    %v1121 = vadd.f32 %v1048, %v1120
    %v1122 = vpop.f32.mrf.mxu0
    %v1123 = vadd.f32 %v1050, %v1122
    %1124 = vmatmul.bf16.gmra.mxu0 %v806
    %v1125 = vpop.f32.mrf.mxu0
    %v1126 = vadd.f32 %v1053, %v1125
    %v1127 = vpop.f32.mrf.mxu0
    %v1128 = vadd.f32 %v1055, %v1127
    %1129 = vmatmul.bf16.gmra.mxu0 %v808
    %v1130 = vpop.f32.mrf.mxu0
    %v1131 = vadd.f32 %v1058, %v1130
    %v1132 = vpop.f32.mrf.mxu0
    %v1133 = vadd.f32 %v1060, %v1132
    %1134 = vmatmul.bf16.gmra.mxu0 %v810
    %v1135 = vpop.f32.mrf.mxu0
    %v1136 = vadd.f32 %v1063, %v1135
    %v1137 = vpop.f32.mrf.mxu0
    %v1138 = vadd.f32 %v1065, %v1137
    %1139 = vmatmul.bf16.gmra.mxu0 %v812
    %v1140 = vpop.f32.mrf.mxu0
    %v1141 = vadd.f32 %v1068, %v1140
    %v1142 = vpop.f32.mrf.mxu0
    %v1143 = vadd.f32 %v1070, %v1142
    %1144 = vmatmul.bf16.gmra.mxu0 %v814
    %v1145 = vpop.f32.mrf.mxu0
    %v1146 = vadd.f32 %v1073, %v1145
    %v1147 = vpop.f32.mrf.mxu0
    %v1148 = vadd.f32 %v1075, %v1147
    %1149 = vmatmul.bf16.gmra.mxu0 %v816
    %v1150 = vpop.f32.mrf.mxu0
    %v1151 = vadd.f32 %v1078, %v1150
    %v1152 = vpop.f32.mrf.mxu0
    %v1153 = vadd.f32 %v1080, %v1152
    %1154 = vmatmul.bf16.gmra.mxu0 %v818
    %v1155 = vpop.f32.mrf.mxu0
    %v1156 = vadd.f32 %v1083, %v1155
    %v1157 = vpop.f32.mrf.mxu0
    %v1158 = vadd.f32 %v1085, %v1157
    %1159 = vmatmul.bf16.gmra.mxu0 %v820
    %v1160 = vpop.f32.mrf.mxu0
    %v1161 = vadd.f32 %v1088, %v1160
    %v1162 = vpop.f32.mrf.mxu0
    %1163 = vdwg.mxu0
    %1164 = vmatpush.bf16.msra.mxu0 %v969
    %1165 = vmatpush.bf16.msra.mxu0 %v967
    %1166 = vmatpush.bf16.msra.mxu0 %v965
    %1167 = vmatpush.bf16.msra.mxu0 %v963
    %1168 = vmatpush.bf16.msra.mxu0 %v961
    %1169 = vmatpush.bf16.msra.mxu0 %v959
    %1170 = vmatpush.bf16.msra.mxu0 %v957
    %1171 = vmatpush.bf16.msra.mxu0 %v955
    %1172 = vmatmul.bf16.gmra.mxu0 %v795
    %v1173 = vpop.f32.mrf.mxu0
    %v1174 = vadd.f32 %v855, %v1173
    %v1175 = vpop.f32.mrf.mxu0
    %v1176 = vadd.f32 %v855, %v1175
    %1177 = vmatmul.bf16.gmra.mxu0 %v797
    %v1178 = vpop.f32.mrf.mxu0
    %v1179 = vadd.f32 %v855, %v1178
    %v1180 = vpop.f32.mrf.mxu0
    %v1181 = vadd.f32 %v855, %v1180
    %1182 = vmatmul.bf16.gmra.mxu0 %v799
    %v1183 = vpop.f32.mrf.mxu0
    %v1184 = vadd.f32 %v855, %v1183
    %v1185 = vpop.f32.mrf.mxu0
    %v1186 = vadd.f32 %v855, %v1185
    %1187 = vmatmul.bf16.gmra.mxu0 %v801
    %v1188 = vpop.f32.mrf.mxu0
    %v1189 = vadd.f32 %v855, %v1188
    %v1190 = vpop.f32.mrf.mxu0
    %v1191 = vadd.f32 %v855, %v1190
    %1192 = vmatmul.bf16.gmra.mxu0 %v803
    %v1193 = vpop.f32.mrf.mxu0
    %v1194 = vadd.f32 %v855, %v1193
    %v1195 = vpop.f32.mrf.mxu0
    %v1196 = vadd.f32 %v855, %v1195
    %1197 = vmatmul.bf16.gmra.mxu0 %v805
    %v1198 = vpop.f32.mrf.mxu0
    %v1199 = vadd.f32 %v855, %v1198
    %v1200 = vpop.f32.mrf.mxu0
    %v1201 = vadd.f32 %v855, %v1200
    %1202 = vmatmul.bf16.gmra.mxu0 %v807
    %v1203 = vpop.f32.mrf.mxu0
    %v1204 = vadd.f32 %v855, %v1203
    %v1205 = vpop.f32.mrf.mxu0
    %v1206 = vadd.f32 %v855, %v1205
    %1207 = vmatmul.bf16.gmra.mxu0 %v809
    %v1208 = vpop.f32.mrf.mxu0
    %v1209 = vadd.f32 %v855, %v1208
    %v1210 = vpop.f32.mrf.mxu0
    %v1211 = vadd.f32 %v855, %v1210
    %1212 = vmatmul.bf16.gmra.mxu0 %v811
    %v1213 = vpop.f32.mrf.mxu0
    %v1214 = vadd.f32 %v855, %v1213
    %v1215 = vpop.f32.mrf.mxu0
    %v1216 = vadd.f32 %v855, %v1215
    %1217 = vmatmul.bf16.gmra.mxu0 %v813
    %v1218 = vpop.f32.mrf.mxu0
    %v1219 = vadd.f32 %v855, %v1218
    %v1220 = vpop.f32.mrf.mxu0
    %v1221 = vadd.f32 %v855, %v1220
    %1222 = vmatmul.bf16.gmra.mxu0 %v815
    %v1223 = vpop.f32.mrf.mxu0
    %v1224 = vadd.f32 %v855, %v1223
    %v1225 = vpop.f32.mrf.mxu0
    %v1226 = vadd.f32 %v855, %v1225
    %1227 = vmatmul.bf16.gmra.mxu0 %v817
    %v1228 = vpop.f32.mrf.mxu0
    %v1229 = vadd.f32 %v855, %v1228
    %v1230 = vpop.f32.mrf.mxu0
    %v1231 = vadd.f32 %v855, %v1230
    %1232 = vmatmul.bf16.gmra.mxu0 %v819
    %v1233 = vpop.f32.mrf.mxu0
    %v1234 = vadd.f32 %v855, %v1233
    %v1235 = vpop.f32.mrf.mxu0
    %1236 = vdwg.mxu0
    %1237 = vmatpush.bf16.msra.mxu0 %v985
    %1238 = vmatpush.bf16.msra.mxu0 %v983
    %1239 = vmatpush.bf16.msra.mxu0 %v981
    %1240 = vmatpush.bf16.msra.mxu0 %v979
    %1241 = vmatpush.bf16.msra.mxu0 %v977
    %1242 = vmatpush.bf16.msra.mxu0 %v975
    %1243 = vmatpush.bf16.msra.mxu0 %v973
    %1244 = vmatpush.bf16.msra.mxu0 %v971
    %1245 = vmatmul.bf16.gmra.mxu0 %v796
    %v1246 = vpop.f32.mrf.mxu0
    %v1247 = vadd.f32 %v1174, %v1246
    %v1248 = vpop.f32.mrf.mxu0
    %v1249 = vadd.f32 %v1176, %v1248
    %1250 = vmatmul.bf16.gmra.mxu0 %v798
    %v1251 = vpop.f32.mrf.mxu0
    %v1252 = vadd.f32 %v1179, %v1251
    %v1253 = vpop.f32.mrf.mxu0
    %v1254 = vadd.f32 %v1181, %v1253
    %1255 = vmatmul.bf16.gmra.mxu0 %v800
    %v1256 = vpop.f32.mrf.mxu0
    %v1257 = vadd.f32 %v1184, %v1256
    %v1258 = vpop.f32.mrf.mxu0
    %v1259 = vadd.f32 %v1186, %v1258
    %1260 = vmatmul.bf16.gmra.mxu0 %v802
    %v1261 = vpop.f32.mrf.mxu0
    %v1262 = vadd.f32 %v1189, %v1261
    %v1263 = vpop.f32.mrf.mxu0
    %v1264 = vadd.f32 %v1191, %v1263
    %1265 = vmatmul.bf16.gmra.mxu0 %v804
    %v1266 = vpop.f32.mrf.mxu0
    %v1267 = vadd.f32 %v1194, %v1266
    %v1268 = vpop.f32.mrf.mxu0
    %v1269 = vadd.f32 %v1196, %v1268
    %1270 = vmatmul.bf16.gmra.mxu0 %v806
    %v1271 = vpop.f32.mrf.mxu0
    %v1272 = vadd.f32 %v1199, %v1271
    %v1273 = vpop.f32.mrf.mxu0
    %v1274 = vadd.f32 %v1201, %v1273
    %1275 = vmatmul.bf16.gmra.mxu0 %v808
    %v1276 = vpop.f32.mrf.mxu0
    %v1277 = vadd.f32 %v1204, %v1276
    %v1278 = vpop.f32.mrf.mxu0
    %v1279 = vadd.f32 %v1206, %v1278
    %1280 = vmatmul.bf16.gmra.mxu0 %v810
    %v1281 = vpop.f32.mrf.mxu0
    %v1282 = vadd.f32 %v1209, %v1281
    %v1283 = vpop.f32.mrf.mxu0
    %v1284 = vadd.f32 %v1211, %v1283
    %1285 = vmatmul.bf16.gmra.mxu0 %v812
    %v1286 = vpop.f32.mrf.mxu0
    %v1287 = vadd.f32 %v1214, %v1286
    %v1288 = vpop.f32.mrf.mxu0
    %v1289 = vadd.f32 %v1216, %v1288
    %1290 = vmatmul.bf16.gmra.mxu0 %v814
    %v1291 = vpop.f32.mrf.mxu0
    %v1292 = vadd.f32 %v1219, %v1291
    %v1293 = vpop.f32.mrf.mxu0
    %v1294 = vadd.f32 %v1221, %v1293
    %1295 = vmatmul.bf16.gmra.mxu0 %v816
    %v1296 = vpop.f32.mrf.mxu0
    %v1297 = vadd.f32 %v1224, %v1296
    %v1298 = vpop.f32.mrf.mxu0
    %v1299 = vadd.f32 %v1226, %v1298
    %1300 = vmatmul.bf16.gmra.mxu0 %v818
    %v1301 = vpop.f32.mrf.mxu0
    %v1302 = vadd.f32 %v1229, %v1301
    %v1303 = vpop.f32.mrf.mxu0
    %v1304 = vadd.f32 %v1231, %v1303
    %1305 = vmatmul.bf16.gmra.mxu0 %v820
    %v1306 = vpop.f32.mrf.mxu0
    %v1307 = vadd.f32 %v1234, %v1306
    %v1308 = vpop.f32.mrf.mxu0
    %1309 = vdwg.mxu0
    %v1310 = vadd.f32 %v1101, %v209
    %v1311 = vadd.f32 %v1247, %v282
    %v1312 = vadd.f32 %v1103, %v211
    %v1313 = vadd.f32 %v1249, %v284
    %v1314 = vadd.f32 %v1106, %v214
    %v1315 = vadd.f32 %v1252, %v287
    %v1316 = vadd.f32 %v1108, %v216
    %v1317 = vadd.f32 %v1254, %v289
    %v1318 = vadd.f32 %v1111, %v219
    %v1319 = vadd.f32 %v1257, %v292
    %v1320 = vadd.f32 %v1113, %v221
    %v1321 = vadd.f32 %v1259, %v294
    %v1322 = vadd.f32 %v1116, %v224
    %v1323 = vadd.f32 %v1262, %v297
    %v1324 = vadd.f32 %v1118, %v226
    %v1325 = vadd.f32 %v1264, %v299
    %v1326 = vadd.f32 %v1121, %v229
    %v1327 = vadd.f32 %v1267, %v302
    %v1328 = vadd.f32 %v1123, %v231
    %v1329 = vadd.f32 %v1269, %v304
    %v1330 = vadd.f32 %v1126, %v234
    %v1331 = vadd.f32 %v1272, %v307
    %v1332 = vadd.f32 %v1128, %v236
    %v1333 = vadd.f32 %v1274, %v309
    %v1334 = vadd.f32 %v1131, %v239
    %v1335 = vadd.f32 %v1277, %v312
    %v1336 = vadd.f32 %v1133, %v241
    %v1337 = vadd.f32 %v1279, %v314
    %v1338 = vadd.f32 %v1136, %v244
    %v1339 = vadd.f32 %v1282, %v317
    %v1340 = vadd.f32 %v1138, %v246
    %v1341 = vadd.f32 %v1284, %v319
    %v1342 = vadd.f32 %v1141, %v249
    %v1343 = vadd.f32 %v1287, %v322
    %v1344 = vadd.f32 %v1143, %v251
    %v1345 = vadd.f32 %v1289, %v324
    %v1346 = vadd.f32 %v1146, %v254
    %v1347 = vadd.f32 %v1292, %v327
    %v1348 = vadd.f32 %v1148, %v256
    %v1349 = vadd.f32 %v1294, %v329
    %v1350 = vadd.f32 %v1151, %v259
    %v1351 = vadd.f32 %v1297, %v332
    %v1352 = vadd.f32 %v1153, %v261
    %v1353 = vadd.f32 %v1299, %v334
    %v1354 = vadd.f32 %v1156, %v264
    %v1355 = vadd.f32 %v1302, %v337
    %v1356 = vadd.f32 %v1158, %v266
    %v1357 = vadd.f32 %v1304, %v339
    %v1358 = vadd.f32 %v1161, %v269
    %v1359 = vadd.f32 %v1307, %v342
    %v1360 = vadd.f32 %v1310, %v1311
    %1361 = vadd.xlane.f32.xlu0 %v1360
    %v1362 = vpop.xlane.xlu0 %1361
    %v1363 = vadd.f32 %v1312, %v1313
    %1364 = vadd.xlane.f32.xlu0 %v1363
    %v1365 = vpop.xlane.xlu0 %1364
    %v1366 = vadd.f32 %v1314, %v1315
    %1367 = vadd.xlane.f32.xlu0 %v1366
    %v1368 = vpop.xlane.xlu0 %1367
    %v1369 = vadd.f32 %v1316, %v1317
    %1370 = vadd.xlane.f32.xlu0 %v1369
    %v1371 = vpop.xlane.xlu0 %1370
    %v1372 = vadd.f32 %v1318, %v1319
    %1373 = vadd.xlane.f32.xlu0 %v1372
    %v1374 = vpop.xlane.xlu0 %1373
    %v1375 = vadd.f32 %v1320, %v1321
    %1376 = vadd.xlane.f32.xlu0 %v1375
    %v1377 = vpop.xlane.xlu0 %1376
    %v1378 = vadd.f32 %v1322, %v1323
    %1379 = vadd.xlane.f32.xlu0 %v1378
    %v1380 = vpop.xlane.xlu0 %1379
    %v1381 = vadd.f32 %v1324, %v1325
    %1382 = vadd.xlane.f32.xlu0 %v1381
    %v1383 = vpop.xlane.xlu0 %1382
    %v1384 = vadd.f32 %v1326, %v1327
    %1385 = vadd.xlane.f32.xlu0 %v1384
    %v1386 = vpop.xlane.xlu0 %1385
    %v1387 = vadd.f32 %v1328, %v1329
    %1388 = vadd.xlane.f32.xlu0 %v1387
    %v1389 = vpop.xlane.xlu0 %1388
    %v1390 = vadd.f32 %v1330, %v1331
    %1391 = vadd.xlane.f32.xlu0 %v1390
    %v1392 = vpop.xlane.xlu0 %1391
    %v1393 = vadd.f32 %v1332, %v1333
    %1394 = vadd.xlane.f32.xlu0 %v1393
    %v1395 = vpop.xlane.xlu0 %1394
    %v1396 = vadd.f32 %v1334, %v1335
    %1397 = vadd.xlane.f32.xlu0 %v1396
    %v1398 = vpop.xlane.xlu0 %1397
    %v1399 = vadd.f32 %v1336, %v1337
    %1400 = vadd.xlane.f32.xlu0 %v1399
    %v1401 = vpop.xlane.xlu0 %1400
    %v1402 = vadd.f32 %v1338, %v1339
    %1403 = vadd.xlane.f32.xlu0 %v1402
    %v1404 = vpop.xlane.xlu0 %1403
    %v1405 = vadd.f32 %v1340, %v1341
    %1406 = vadd.xlane.f32.xlu0 %v1405
    %v1407 = vpop.xlane.xlu0 %1406
    %v1408 = vadd.f32 %v1342, %v1343
    %1409 = vadd.xlane.f32.xlu0 %v1408
    %v1410 = vpop.xlane.xlu0 %1409
    %v1411 = vadd.f32 %v1344, %v1345
    %1412 = vadd.xlane.f32.xlu0 %v1411
    %v1413 = vpop.xlane.xlu0 %1412
    %v1414 = vadd.f32 %v1346, %v1347
    %1415 = vadd.xlane.f32.xlu0 %v1414
    %v1416 = vpop.xlane.xlu0 %1415
    %v1417 = vadd.f32 %v1348, %v1349
    %1418 = vadd.xlane.f32.xlu0 %v1417
    %v1419 = vpop.xlane.xlu0 %1418
    %v1420 = vadd.f32 %v1350, %v1351
    %1421 = vadd.xlane.f32.xlu0 %v1420
    %v1422 = vpop.xlane.xlu0 %1421
    %v1423 = vadd.f32 %v1352, %v1353
    %1424 = vadd.xlane.f32.xlu0 %v1423
    %v1425 = vpop.xlane.xlu0 %1424
    %v1426 = vadd.f32 %v1354, %v1355
    %1427 = vadd.xlane.f32.xlu0 %v1426
    %v1428 = vpop.xlane.xlu0 %1427
    %v1429 = vadd.f32 %v1356, %v1357
    %1430 = vadd.xlane.f32.xlu0 %v1429
    %v1431 = vpop.xlane.xlu0 %1430
    %v1432 = vadd.f32 %v1358, %v1359
    %1433 = vadd.xlane.f32.xlu0 %v1432
    %v1434 = vpop.xlane.xlu0 %1433
    %v1435 = vrcp.pop 256.0
    %v1436 = vmul.f32 256.0, %v1435
    %v1437 = vsub.f32 1.0, %v1436
    %v1438 = vmul.f32 %v1435, %v1437
    %v1439 = vadd.f32 %v1435, %v1438
    %vm1440 = vweird.f32 %v1435
    %v1441 = vsel %vm1440, %v1435, %v1439
    %v1442 = vmul.f32 %v1362, %v1441
    %v1443 = vmul.f32 %v1365, %v1441
    %v1444 = vmul.f32 %v1368, %v1441
    %v1445 = vmul.f32 %v1371, %v1441
    %v1446 = vmul.f32 %v1374, %v1441
    %v1447 = vmul.f32 %v1377, %v1441
    %v1448 = vmul.f32 %v1380, %v1441
    %v1449 = vmul.f32 %v1383, %v1441
    %v1450 = vmul.f32 %v1386, %v1441
    %v1451 = vmul.f32 %v1389, %v1441
    %v1452 = vmul.f32 %v1392, %v1441
    %v1453 = vmul.f32 %v1395, %v1441
    %v1454 = vmul.f32 %v1398, %v1441
    %v1455 = vmul.f32 %v1401, %v1441
    %v1456 = vmul.f32 %v1404, %v1441
    %v1457 = vmul.f32 %v1407, %v1441
    %v1458 = vmul.f32 %v1410, %v1441
    %v1459 = vmul.f32 %v1413, %v1441
    %v1460 = vmul.f32 %v1416, %v1441
    %v1461 = vmul.f32 %v1419, %v1441
    %v1462 = vmul.f32 %v1422, %v1441
    %v1463 = vmul.f32 %v1425, %v1441
    %v1464 = vmul.f32 %v1428, %v1441
    %v1465 = vmul.f32 %v1431, %v1441
    %v1466 = vmul.f32 %v1434, %v1441
    %v1467 = vsub.f32 %v1310, %v1442
    %v1468 = vsub.f32 %v1311, %v1442
    %v1469 = vsub.f32 %v1312, %v1443
    %v1470 = vsub.f32 %v1313, %v1443
    %v1471 = vsub.f32 %v1314, %v1444
    %v1472 = vsub.f32 %v1315, %v1444
    %v1473 = vsub.f32 %v1316, %v1445
    %v1474 = vsub.f32 %v1317, %v1445
    %v1475 = vsub.f32 %v1318, %v1446
    %v1476 = vsub.f32 %v1319, %v1446
    %v1477 = vsub.f32 %v1320, %v1447
    %v1478 = vsub.f32 %v1321, %v1447
    %v1479 = vsub.f32 %v1322, %v1448
    %v1480 = vsub.f32 %v1323, %v1448
    %v1481 = vsub.f32 %v1324, %v1449
    %v1482 = vsub.f32 %v1325, %v1449
    %v1483 = vsub.f32 %v1326, %v1450
    %v1484 = vsub.f32 %v1327, %v1450
    %v1485 = vsub.f32 %v1328, %v1451
    %v1486 = vsub.f32 %v1329, %v1451
    %v1487 = vsub.f32 %v1330, %v1452
    %v1488 = vsub.f32 %v1331, %v1452
    %v1489 = vsub.f32 %v1332, %v1453
    %v1490 = vsub.f32 %v1333, %v1453
    %v1491 = vsub.f32 %v1334, %v1454
    %v1492 = vsub.f32 %v1335, %v1454
    %v1493 = vsub.f32 %v1336, %v1455
    %v1494 = vsub.f32 %v1337, %v1455
    %v1495 = vsub.f32 %v1338, %v1456
    %v1496 = vsub.f32 %v1339, %v1456
    %v1497 = vsub.f32 %v1340, %v1457
    %v1498 = vsub.f32 %v1341, %v1457
    %v1499 = vsub.f32 %v1342, %v1458
    %v1500 = vsub.f32 %v1343, %v1458
    %v1501 = vsub.f32 %v1344, %v1459
    %v1502 = vsub.f32 %v1345, %v1459
    %v1503 = vsub.f32 %v1346, %v1460
    %v1504 = vsub.f32 %v1347, %v1460
    %v1505 = vsub.f32 %v1348, %v1461
    %v1506 = vsub.f32 %v1349, %v1461
    %v1507 = vsub.f32 %v1350, %v1462
    %v1508 = vsub.f32 %v1351, %v1462
    %v1509 = vsub.f32 %v1352, %v1463
    %v1510 = vsub.f32 %v1353, %v1463
    %v1511 = vsub.f32 %v1354, %v1464
    %v1512 = vsub.f32 %v1355, %v1464
    %v1513 = vsub.f32 %v1356, %v1465
    %v1514 = vsub.f32 %v1357, %v1465
    %v1515 = vsub.f32 %v1358, %v1466
    %v1516 = vsub.f32 %v1359, %v1466
    %v1517 = vmul.f32 %v1467, %v1467
    %v1518 = vmul.f32 %v1468, %v1468
    %v1519 = vmul.f32 %v1469, %v1469
    %v1520 = vmul.f32 %v1470, %v1470
    %v1521 = vmul.f32 %v1471, %v1471
    %v1522 = vmul.f32 %v1472, %v1472
    %v1523 = vmul.f32 %v1473, %v1473
    %v1524 = vmul.f32 %v1474, %v1474
    %v1525 = vmul.f32 %v1475, %v1475
    %v1526 = vmul.f32 %v1476, %v1476
    %v1527 = vmul.f32 %v1477, %v1477
    %v1528 = vmul.f32 %v1478, %v1478
    %v1529 = vmul.f32 %v1479, %v1479
    %v1530 = vmul.f32 %v1480, %v1480
    %v1531 = vmul.f32 %v1481, %v1481
    %v1532 = vmul.f32 %v1482, %v1482
    %v1533 = vmul.f32 %v1483, %v1483
    %v1534 = vmul.f32 %v1484, %v1484
    %v1535 = vmul.f32 %v1485, %v1485
    %v1536 = vmul.f32 %v1486, %v1486
    %v1537 = vmul.f32 %v1487, %v1487
    %v1538 = vmul.f32 %v1488, %v1488
    %v1539 = vmul.f32 %v1489, %v1489
    %v1540 = vmul.f32 %v1490, %v1490
    %v1541 = vmul.f32 %v1491, %v1491
    %v1542 = vmul.f32 %v1492, %v1492
    %v1543 = vmul.f32 %v1493, %v1493
    %v1544 = vmul.f32 %v1494, %v1494
    %v1545 = vmul.f32 %v1495, %v1495
    %v1546 = vmul.f32 %v1496, %v1496
    %v1547 = vmul.f32 %v1497, %v1497
    %v1548 = vmul.f32 %v1498, %v1498
    %v1549 = vmul.f32 %v1499, %v1499
    %v1550 = vmul.f32 %v1500, %v1500
    %v1551 = vmul.f32 %v1501, %v1501
    %v1552 = vmul.f32 %v1502, %v1502
    %v1553 = vmul.f32 %v1503, %v1503
    %v1554 = vmul.f32 %v1504, %v1504
    %v1555 = vmul.f32 %v1505, %v1505
    %v1556 = vmul.f32 %v1506, %v1506
    %v1557 = vmul.f32 %v1507, %v1507
    %v1558 = vmul.f32 %v1508, %v1508
    %v1559 = vmul.f32 %v1509, %v1509
    %v1560 = vmul.f32 %v1510, %v1510
    %v1561 = vmul.f32 %v1511, %v1511
    %v1562 = vmul.f32 %v1512, %v1512
    %v1563 = vmul.f32 %v1513, %v1513
    %v1564 = vmul.f32 %v1514, %v1514
    %v1565 = vmul.f32 %v1515, %v1515
    %v1566 = vmul.f32 %v1516, %v1516
    %v1567 = vadd.f32 %v1517, %v1518
    %1568 = vadd.xlane.f32.xlu0 %v1567
    %v1569 = vpop.xlane.xlu0 %1568
    %v1570 = vadd.f32 %v1519, %v1520
    %1571 = vadd.xlane.f32.xlu0 %v1570
    %v1572 = vpop.xlane.xlu0 %1571
    %v1573 = vadd.f32 %v1521, %v1522
    %1574 = vadd.xlane.f32.xlu0 %v1573
    %v1575 = vpop.xlane.xlu0 %1574
    %v1576 = vadd.f32 %v1523, %v1524
    %1577 = vadd.xlane.f32.xlu0 %v1576
    %v1578 = vpop.xlane.xlu0 %1577
    %v1579 = vadd.f32 %v1525, %v1526
    %1580 = vadd.xlane.f32.xlu0 %v1579
    %v1581 = vpop.xlane.xlu0 %1580
    %v1582 = vadd.f32 %v1527, %v1528
    %1583 = vadd.xlane.f32.xlu0 %v1582
    %v1584 = vpop.xlane.xlu0 %1583
    %v1585 = vadd.f32 %v1529, %v1530
    %1586 = vadd.xlane.f32.xlu0 %v1585
    %v1587 = vpop.xlane.xlu0 %1586
    %v1588 = vadd.f32 %v1531, %v1532
    %1589 = vadd.xlane.f32.xlu0 %v1588
    %v1590 = vpop.xlane.xlu0 %1589
    %v1591 = vadd.f32 %v1533, %v1534
    %1592 = vadd.xlane.f32.xlu0 %v1591
    %v1593 = vpop.xlane.xlu0 %1592
    %v1594 = vadd.f32 %v1535, %v1536
    %1595 = vadd.xlane.f32.xlu0 %v1594
    %v1596 = vpop.xlane.xlu0 %1595
    %v1597 = vadd.f32 %v1537, %v1538
    %1598 = vadd.xlane.f32.xlu0 %v1597
    %v1599 = vpop.xlane.xlu0 %1598
    %v1600 = vadd.f32 %v1539, %v1540
    %1601 = vadd.xlane.f32.xlu0 %v1600
    %v1602 = vpop.xlane.xlu0 %1601
    %v1603 = vadd.f32 %v1541, %v1542
    %1604 = vadd.xlane.f32.xlu0 %v1603
    %v1605 = vpop.xlane.xlu0 %1604
    %v1606 = vadd.f32 %v1543, %v1544
    %1607 = vadd.xlane.f32.xlu0 %v1606
    %v1608 = vpop.xlane.xlu0 %1607
    %v1609 = vadd.f32 %v1545, %v1546
    %1610 = vadd.xlane.f32.xlu0 %v1609
    %v1611 = vpop.xlane.xlu0 %1610
    %v1612 = vadd.f32 %v1547, %v1548
    %1613 = vadd.xlane.f32.xlu0 %v1612
    %v1614 = vpop.xlane.xlu0 %1613
    %v1615 = vadd.f32 %v1549, %v1550
    %1616 = vadd.xlane.f32.xlu0 %v1615
    %v1617 = vpop.xlane.xlu0 %1616
    %v1618 = vadd.f32 %v1551, %v1552
    %1619 = vadd.xlane.f32.xlu0 %v1618
    %v1620 = vpop.xlane.xlu0 %1619
    %v1621 = vadd.f32 %v1553, %v1554
    %1622 = vadd.xlane.f32.xlu0 %v1621
    %v1623 = vpop.xlane.xlu0 %1622
    %v1624 = vadd.f32 %v1555, %v1556
    %1625 = vadd.xlane.f32.xlu0 %v1624
    %v1626 = vpop.xlane.xlu0 %1625
    %v1627 = vadd.f32 %v1557, %v1558
    %1628 = vadd.xlane.f32.xlu0 %v1627
    %v1629 = vpop.xlane.xlu0 %1628
    %v1630 = vadd.f32 %v1559, %v1560
    %1631 = vadd.xlane.f32.xlu0 %v1630
    %v1632 = vpop.xlane.xlu0 %1631
    %v1633 = vadd.f32 %v1561, %v1562
    %1634 = vadd.xlane.f32.xlu0 %v1633
    %v1635 = vpop.xlane.xlu0 %1634
    %v1636 = vadd.f32 %v1563, %v1564
    %1637 = vadd.xlane.f32.xlu0 %v1636
    %v1638 = vpop.xlane.xlu0 %1637
    %v1639 = vadd.f32 %v1565, %v1566
    %1640 = vadd.xlane.f32.xlu0 %v1639
    %v1641 = vpop.xlane.xlu0 %1640
    %v1642 = vmul.f32 %v1569, %v1441
    %v1643 = vmul.f32 %v1572, %v1441
    %v1644 = vmul.f32 %v1575, %v1441
    %v1645 = vmul.f32 %v1578, %v1441
    %v1646 = vmul.f32 %v1581, %v1441
    %v1647 = vmul.f32 %v1584, %v1441
    %v1648 = vmul.f32 %v1587, %v1441
    %v1649 = vmul.f32 %v1590, %v1441
    %v1650 = vmul.f32 %v1593, %v1441
    %v1651 = vmul.f32 %v1596, %v1441
    %v1652 = vmul.f32 %v1599, %v1441
    %v1653 = vmul.f32 %v1602, %v1441
    %v1654 = vmul.f32 %v1605, %v1441
    %v1655 = vmul.f32 %v1608, %v1441
    %v1656 = vmul.f32 %v1611, %v1441
    %v1657 = vmul.f32 %v1614, %v1441
    %v1658 = vmul.f32 %v1617, %v1441
    %v1659 = vmul.f32 %v1620, %v1441
    %v1660 = vmul.f32 %v1623, %v1441
    %v1661 = vmul.f32 %v1626, %v1441
    %v1662 = vmul.f32 %v1629, %v1441
    %v1663 = vmul.f32 %v1632, %v1441
    %v1664 = vmul.f32 %v1635, %v1441
    %v1665 = vmul.f32 %v1638, %v1441
    %v1666 = vmul.f32 %v1641, %v1441
    %v1667 = vadd.f32 %v1642, 1e-05
    %v1668 = vadd.f32 %v1643, 1e-05
    %v1669 = vadd.f32 %v1644, 1e-05
    %v1670 = vadd.f32 %v1645, 1e-05
    %v1671 = vadd.f32 %v1646, 1e-05
    %v1672 = vadd.f32 %v1647, 1e-05
    %v1673 = vadd.f32 %v1648, 1e-05
    %v1674 = vadd.f32 %v1649, 1e-05
    %v1675 = vadd.f32 %v1650, 1e-05
    %v1676 = vadd.f32 %v1651, 1e-05
    %v1677 = vadd.f32 %v1652, 1e-05
    %v1678 = vadd.f32 %v1653, 1e-05
    %v1679 = vadd.f32 %v1654, 1e-05
    %v1680 = vadd.f32 %v1655, 1e-05
    %v1681 = vadd.f32 %v1656, 1e-05
    %v1682 = vadd.f32 %v1657, 1e-05
    %v1683 = vadd.f32 %v1658, 1e-05
    %v1684 = vadd.f32 %v1659, 1e-05
    %v1685 = vadd.f32 %v1660, 1e-05
    %v1686 = vadd.f32 %v1661, 1e-05
    %v1687 = vadd.f32 %v1662, 1e-05
    %v1688 = vadd.f32 %v1663, 1e-05
    %v1689 = vadd.f32 %v1664, 1e-05
    %v1690 = vadd.f32 %v1665, 1e-05
    %v1691 = vadd.f32 %v1666, 1e-05
    %v1692 = vrsqrt.pop %v1667
    %v1693 = vmul.f32 %v1692, %v1667
    %v1694 = vmul.f32 %v1693, %v1692
    %v1695 = vmul.f32 0.5, %v1694
    %v1696 = vsub.f32 1.5, %v1695
    %v1697 = vmul.f32 %v1692, %v1696
    %vm1698 = vweird.f32 %v1667
    %vm1699 = vweird.f32 %v1692
    %vm1700 = vmor %vm1698, %vm1699
    %v1701 = vsel %vm1700, %v1692, %v1697
    %v1702 = vrsqrt.pop %v1668
    %v1703 = vmul.f32 %v1702, %v1668
    %v1704 = vmul.f32 %v1703, %v1702
    %v1705 = vmul.f32 0.5, %v1704
    %v1706 = vsub.f32 1.5, %v1705
    %v1707 = vmul.f32 %v1702, %v1706
    %vm1708 = vweird.f32 %v1668
    %vm1709 = vweird.f32 %v1702
    %vm1710 = vmor %vm1708, %vm1709
    %v1711 = vsel %vm1710, %v1702, %v1707
    %v1712 = vrsqrt.pop %v1669
    %v1713 = vmul.f32 %v1712, %v1669
    %v1714 = vmul.f32 %v1713, %v1712
    %v1715 = vmul.f32 0.5, %v1714
    %v1716 = vsub.f32 1.5, %v1715
    %v1717 = vmul.f32 %v1712, %v1716
    %vm1718 = vweird.f32 %v1669
    %vm1719 = vweird.f32 %v1712
    %vm1720 = vmor %vm1718, %vm1719
    %v1721 = vsel %vm1720, %v1712, %v1717
    %v1722 = vrsqrt.pop %v1670
    %v1723 = vmul.f32 %v1722, %v1670
    %v1724 = vmul.f32 %v1723, %v1722
    %v1725 = vmul.f32 0.5, %v1724
    %v1726 = vsub.f32 1.5, %v1725
    %v1727 = vmul.f32 %v1722, %v1726
    %vm1728 = vweird.f32 %v1670
    %vm1729 = vweird.f32 %v1722
    %vm1730 = vmor %vm1728, %vm1729
    %v1731 = vsel %vm1730, %v1722, %v1727
    %v1732 = vrsqrt.pop %v1671
    %v1733 = vmul.f32 %v1732, %v1671
    %v1734 = vmul.f32 %v1733, %v1732
    %v1735 = vmul.f32 0.5, %v1734
    %v1736 = vsub.f32 1.5, %v1735
    %v1737 = vmul.f32 %v1732, %v1736
    %vm1738 = vweird.f32 %v1671
    %vm1739 = vweird.f32 %v1732
    %vm1740 = vmor %vm1738, %vm1739
    %v1741 = vsel %vm1740, %v1732, %v1737
    %v1742 = vrsqrt.pop %v1672
    %v1743 = vmul.f32 %v1742, %v1672
    %v1744 = vmul.f32 %v1743, %v1742
    %v1745 = vmul.f32 0.5, %v1744
    %v1746 = vsub.f32 1.5, %v1745
    %v1747 = vmul.f32 %v1742, %v1746
    %vm1748 = vweird.f32 %v1672
    %vm1749 = vweird.f32 %v1742
    %vm1750 = vmor %vm1748, %vm1749
    %v1751 = vsel %vm1750, %v1742, %v1747
    %v1752 = vrsqrt.pop %v1673
    %v1753 = vmul.f32 %v1752, %v1673
    %v1754 = vmul.f32 %v1753, %v1752
    %v1755 = vmul.f32 0.5, %v1754
    %v1756 = vsub.f32 1.5, %v1755
    %v1757 = vmul.f32 %v1752, %v1756
    %vm1758 = vweird.f32 %v1673
    %vm1759 = vweird.f32 %v1752
    %vm1760 = vmor %vm1758, %vm1759
    %v1761 = vsel %vm1760, %v1752, %v1757
    %v1762 = vrsqrt.pop %v1674
    %v1763 = vmul.f32 %v1762, %v1674
    %v1764 = vmul.f32 %v1763, %v1762
    %v1765 = vmul.f32 0.5, %v1764
    %v1766 = vsub.f32 1.5, %v1765
    %v1767 = vmul.f32 %v1762, %v1766
    %vm1768 = vweird.f32 %v1674
    %vm1769 = vweird.f32 %v1762
    %vm1770 = vmor %vm1768, %vm1769
    %v1771 = vsel %vm1770, %v1762, %v1767
    %v1772 = vrsqrt.pop %v1675
    %v1773 = vmul.f32 %v1772, %v1675
    %v1774 = vmul.f32 %v1773, %v1772
    %v1775 = vmul.f32 0.5, %v1774
    %v1776 = vsub.f32 1.5, %v1775
    %v1777 = vmul.f32 %v1772, %v1776
    %vm1778 = vweird.f32 %v1675
    %vm1779 = vweird.f32 %v1772
    %vm1780 = vmor %vm1778, %vm1779
    %v1781 = vsel %vm1780, %v1772, %v1777
    %v1782 = vrsqrt.pop %v1676
    %v1783 = vmul.f32 %v1782, %v1676
    %v1784 = vmul.f32 %v1783, %v1782
    %v1785 = vmul.f32 0.5, %v1784
    %v1786 = vsub.f32 1.5, %v1785
    %v1787 = vmul.f32 %v1782, %v1786
    %vm1788 = vweird.f32 %v1676
    %vm1789 = vweird.f32 %v1782
    %vm1790 = vmor %vm1788, %vm1789
    %v1791 = vsel %vm1790, %v1782, %v1787
    %v1792 = vrsqrt.pop %v1677
    %v1793 = vmul.f32 %v1792, %v1677
    %v1794 = vmul.f32 %v1793, %v1792
    %v1795 = vmul.f32 0.5, %v1794
    %v1796 = vsub.f32 1.5, %v1795
    %v1797 = vmul.f32 %v1792, %v1796
    %vm1798 = vweird.f32 %v1677
    %vm1799 = vweird.f32 %v1792
    %vm1800 = vmor %vm1798, %vm1799
    %v1801 = vsel %vm1800, %v1792, %v1797
    %v1802 = vrsqrt.pop %v1678
    %v1803 = vmul.f32 %v1802, %v1678
    %v1804 = vmul.f32 %v1803, %v1802
    %v1805 = vmul.f32 0.5, %v1804
    %v1806 = vsub.f32 1.5, %v1805
    %v1807 = vmul.f32 %v1802, %v1806
    %vm1808 = vweird.f32 %v1678
    %vm1809 = vweird.f32 %v1802
    %vm1810 = vmor %vm1808, %vm1809
    %v1811 = vsel %vm1810, %v1802, %v1807
    %v1812 = vrsqrt.pop %v1679
    %v1813 = vmul.f32 %v1812, %v1679
    %v1814 = vmul.f32 %v1813, %v1812
    %v1815 = vmul.f32 0.5, %v1814
    %v1816 = vsub.f32 1.5, %v1815
    %v1817 = vmul.f32 %v1812, %v1816
    %vm1818 = vweird.f32 %v1679
    %vm1819 = vweird.f32 %v1812
    %vm1820 = vmor %vm1818, %vm1819
    %v1821 = vsel %vm1820, %v1812, %v1817
    %v1822 = vrsqrt.pop %v1680
    %v1823 = vmul.f32 %v1822, %v1680
    %v1824 = vmul.f32 %v1823, %v1822
    %v1825 = vmul.f32 0.5, %v1824
    %v1826 = vsub.f32 1.5, %v1825
    %v1827 = vmul.f32 %v1822, %v1826
    %vm1828 = vweird.f32 %v1680
    %vm1829 = vweird.f32 %v1822
    %vm1830 = vmor %vm1828, %vm1829
    %v1831 = vsel %vm1830, %v1822, %v1827
    %v1832 = vrsqrt.pop %v1681
    %v1833 = vmul.f32 %v1832, %v1681
    %v1834 = vmul.f32 %v1833, %v1832
    %v1835 = vmul.f32 0.5, %v1834
    %v1836 = vsub.f32 1.5, %v1835
    %v1837 = vmul.f32 %v1832, %v1836
    %vm1838 = vweird.f32 %v1681
    %vm1839 = vweird.f32 %v1832
    %vm1840 = vmor %vm1838, %vm1839
    %v1841 = vsel %vm1840, %v1832, %v1837
    %v1842 = vrsqrt.pop %v1682
    %v1843 = vmul.f32 %v1842, %v1682
    %v1844 = vmul.f32 %v1843, %v1842
    %v1845 = vmul.f32 0.5, %v1844
    %v1846 = vsub.f32 1.5, %v1845
    %v1847 = vmul.f32 %v1842, %v1846
    %vm1848 = vweird.f32 %v1682
    %vm1849 = vweird.f32 %v1842
    %vm1850 = vmor %vm1848, %vm1849
    %v1851 = vsel %vm1850, %v1842, %v1847
    %v1852 = vrsqrt.pop %v1683
    %v1853 = vmul.f32 %v1852, %v1683
    %v1854 = vmul.f32 %v1853, %v1852
    %v1855 = vmul.f32 0.5, %v1854
    %v1856 = vsub.f32 1.5, %v1855
    %v1857 = vmul.f32 %v1852, %v1856
    %vm1858 = vweird.f32 %v1683
    %vm1859 = vweird.f32 %v1852
    %vm1860 = vmor %vm1858, %vm1859
    %v1861 = vsel %vm1860, %v1852, %v1857
    %v1862 = vrsqrt.pop %v1684
    %v1863 = vmul.f32 %v1862, %v1684
    %v1864 = vmul.f32 %v1863, %v1862
    %v1865 = vmul.f32 0.5, %v1864
    %v1866 = vsub.f32 1.5, %v1865
    %v1867 = vmul.f32 %v1862, %v1866
    %vm1868 = vweird.f32 %v1684
    %vm1869 = vweird.f32 %v1862
    %vm1870 = vmor %vm1868, %vm1869
    %v1871 = vsel %vm1870, %v1862, %v1867
    %v1872 = vrsqrt.pop %v1685
    %v1873 = vmul.f32 %v1872, %v1685
    %v1874 = vmul.f32 %v1873, %v1872
    %v1875 = vmul.f32 0.5, %v1874
    %v1876 = vsub.f32 1.5, %v1875
    %v1877 = vmul.f32 %v1872, %v1876
    %vm1878 = vweird.f32 %v1685
    %vm1879 = vweird.f32 %v1872
    %vm1880 = vmor %vm1878, %vm1879
    %v1881 = vsel %vm1880, %v1872, %v1877
    %v1882 = vrsqrt.pop %v1686
    %v1883 = vmul.f32 %v1882, %v1686
    %v1884 = vmul.f32 %v1883, %v1882
    %v1885 = vmul.f32 0.5, %v1884
    %v1886 = vsub.f32 1.5, %v1885
    %v1887 = vmul.f32 %v1882, %v1886
    %vm1888 = vweird.f32 %v1686
    %vm1889 = vweird.f32 %v1882
    %vm1890 = vmor %vm1888, %vm1889
    %v1891 = vsel %vm1890, %v1882, %v1887
    %v1892 = vrsqrt.pop %v1687
    %v1893 = vmul.f32 %v1892, %v1687
    %v1894 = vmul.f32 %v1893, %v1892
    %v1895 = vmul.f32 0.5, %v1894
    %v1896 = vsub.f32 1.5, %v1895
    %v1897 = vmul.f32 %v1892, %v1896
    %vm1898 = vweird.f32 %v1687
    %vm1899 = vweird.f32 %v1892
    %vm1900 = vmor %vm1898, %vm1899
    %v1901 = vsel %vm1900, %v1892, %v1897
    %v1902 = vrsqrt.pop %v1688
    %v1903 = vmul.f32 %v1902, %v1688
    %v1904 = vmul.f32 %v1903, %v1902
    %v1905 = vmul.f32 0.5, %v1904
    %v1906 = vsub.f32 1.5, %v1905
    %v1907 = vmul.f32 %v1902, %v1906
    %vm1908 = vweird.f32 %v1688
    %vm1909 = vweird.f32 %v1902
    %vm1910 = vmor %vm1908, %vm1909
    %v1911 = vsel %vm1910, %v1902, %v1907
    %v1912 = vrsqrt.pop %v1689
    %v1913 = vmul.f32 %v1912, %v1689
    %v1914 = vmul.f32 %v1913, %v1912
    %v1915 = vmul.f32 0.5, %v1914
    %v1916 = vsub.f32 1.5, %v1915
    %v1917 = vmul.f32 %v1912, %v1916
    %vm1918 = vweird.f32 %v1689
    %vm1919 = vweird.f32 %v1912
    %vm1920 = vmor %vm1918, %vm1919
    %v1921 = vsel %vm1920, %v1912, %v1917
    %v1922 = vrsqrt.pop %v1690
    %v1923 = vmul.f32 %v1922, %v1690
    %v1924 = vmul.f32 %v1923, %v1922
    %v1925 = vmul.f32 0.5, %v1924
    %v1926 = vsub.f32 1.5, %v1925
    %v1927 = vmul.f32 %v1922, %v1926
    %vm1928 = vweird.f32 %v1690
    %vm1929 = vweird.f32 %v1922
    %vm1930 = vmor %vm1928, %vm1929
    %v1931 = vsel %vm1930, %v1922, %v1927
    %v1932 = vrsqrt.pop %v1691
    %v1933 = vmul.f32 %v1932, %v1691
    %v1934 = vmul.f32 %v1933, %v1932
    %v1935 = vmul.f32 0.5, %v1934
    %v1936 = vsub.f32 1.5, %v1935
    %v1937 = vmul.f32 %v1932, %v1936
    %vm1938 = vweird.f32 %v1691
    %vm1939 = vweird.f32 %v1932
    %vm1940 = vmor %vm1938, %vm1939
    %v1941 = vsel %vm1940, %v1932, %v1937
    %v1942 = vmul.f32 %v1467, %v1701
    %v1943 = vmul.f32 %v1468, %v1701
    %v1944 = vmul.f32 %v1469, %v1711
    %v1945 = vmul.f32 %v1470, %v1711
    %v1946 = vmul.f32 %v1471, %v1721
    %v1947 = vmul.f32 %v1472, %v1721
    %v1948 = vmul.f32 %v1473, %v1731
    %v1949 = vmul.f32 %v1474, %v1731
    %v1950 = vmul.f32 %v1475, %v1741
    %v1951 = vmul.f32 %v1476, %v1741
    %v1952 = vmul.f32 %v1477, %v1751
    %v1953 = vmul.f32 %v1478, %v1751
    %v1954 = vmul.f32 %v1479, %v1761
    %v1955 = vmul.f32 %v1480, %v1761
    %v1956 = vmul.f32 %v1481, %v1771
    %v1957 = vmul.f32 %v1482, %v1771
    %v1958 = vmul.f32 %v1483, %v1781
    %v1959 = vmul.f32 %v1484, %v1781
    %v1960 = vmul.f32 %v1485, %v1791
    %v1961 = vmul.f32 %v1486, %v1791
    %v1962 = vmul.f32 %v1487, %v1801
    %v1963 = vmul.f32 %v1488, %v1801
    %v1964 = vmul.f32 %v1489, %v1811
    %v1965 = vmul.f32 %v1490, %v1811
    %v1966 = vmul.f32 %v1491, %v1821
    %v1967 = vmul.f32 %v1492, %v1821
    %v1968 = vmul.f32 %v1493, %v1831
    %v1969 = vmul.f32 %v1494, %v1831
    %v1970 = vmul.f32 %v1495, %v1841
    %v1971 = vmul.f32 %v1496, %v1841
    %v1972 = vmul.f32 %v1497, %v1851
    %v1973 = vmul.f32 %v1498, %v1851
    %v1974 = vmul.f32 %v1499, %v1861
    %v1975 = vmul.f32 %v1500, %v1861
    %v1976 = vmul.f32 %v1501, %v1871
    %v1977 = vmul.f32 %v1502, %v1871
    %v1978 = vmul.f32 %v1503, %v1881
    %v1979 = vmul.f32 %v1504, %v1881
    %v1980 = vmul.f32 %v1505, %v1891
    %v1981 = vmul.f32 %v1506, %v1891
    %v1982 = vmul.f32 %v1507, %v1901
    %v1983 = vmul.f32 %v1508, %v1901
    %v1984 = vmul.f32 %v1509, %v1911
    %v1985 = vmul.f32 %v1510, %v1911
    %v1986 = vmul.f32 %v1511, %v1921
    %v1987 = vmul.f32 %v1512, %v1921
    %v1988 = vmul.f32 %v1513, %v1931
    %v1989 = vmul.f32 %v1514, %v1931
    %v1990 = vmul.f32 %v1515, %v1941
    %v1991 = vmul.f32 %v1516, %v1941
    %v1993 = vperm.slane %v39, 0
    %v1994 = vperm.slane %v39, 1
    %v1997 = vmul.f32 %v1942, %v1993
    %v1998 = vmul.f32 %v1943, %v1994
    %v1999 = vmul.f32 %v1944, %v1993
    %v2000 = vmul.f32 %v1945, %v1994
    %v2001 = vmul.f32 %v1946, %v1993
    %v2002 = vmul.f32 %v1947, %v1994
    %v2003 = vmul.f32 %v1948, %v1993
    %v2004 = vmul.f32 %v1949, %v1994
    %v2005 = vmul.f32 %v1950, %v1993
    %v2006 = vmul.f32 %v1951, %v1994
    %v2007 = vmul.f32 %v1952, %v1993
    %v2008 = vmul.f32 %v1953, %v1994
    %v2009 = vmul.f32 %v1954, %v1993
    %v2010 = vmul.f32 %v1955, %v1994
    %v2011 = vmul.f32 %v1956, %v1993
    %v2012 = vmul.f32 %v1957, %v1994
    %v2013 = vmul.f32 %v1958, %v1993
    %v2014 = vmul.f32 %v1959, %v1994
    %v2015 = vmul.f32 %v1960, %v1993
    %v2016 = vmul.f32 %v1961, %v1994
    %v2017 = vmul.f32 %v1962, %v1993
    %v2018 = vmul.f32 %v1963, %v1994
    %v2019 = vmul.f32 %v1964, %v1993
    %v2020 = vmul.f32 %v1965, %v1994
    %v2021 = vmul.f32 %v1966, %v1993
    %v2022 = vmul.f32 %v1967, %v1994
    %v2023 = vmul.f32 %v1968, %v1993
    %v2024 = vmul.f32 %v1969, %v1994
    %v2025 = vmul.f32 %v1970, %v1993
    %v2026 = vmul.f32 %v1971, %v1994
    %v2027 = vmul.f32 %v1972, %v1993
    %v2028 = vmul.f32 %v1973, %v1994
    %v2029 = vmul.f32 %v1974, %v1993
    %v2030 = vmul.f32 %v1975, %v1994
    %v2031 = vmul.f32 %v1976, %v1993
    %v2032 = vmul.f32 %v1977, %v1994
    %v2033 = vmul.f32 %v1978, %v1993
    %v2034 = vmul.f32 %v1979, %v1994
    %v2035 = vmul.f32 %v1980, %v1993
    %v2036 = vmul.f32 %v1981, %v1994
    %v2037 = vmul.f32 %v1982, %v1993
    %v2038 = vmul.f32 %v1983, %v1994
    %v2039 = vmul.f32 %v1984, %v1993
    %v2040 = vmul.f32 %v1985, %v1994
    %v2041 = vmul.f32 %v1986, %v1993
    %v2042 = vmul.f32 %v1987, %v1994
    %v2043 = vmul.f32 %v1988, %v1993
    %v2044 = vmul.f32 %v1989, %v1994
    %v2045 = vmul.f32 %v1990, %v1993
    %v2046 = vmul.f32 %v1991, %v1994
    %v2048 = vperm.slane %v41, 0
    %v2049 = vperm.slane %v41, 1
    %v2052 = vadd.f32 %v1997, %v2048
    %v2053 = vadd.f32 %v1998, %v2049
    %v2054 = vadd.f32 %v1999, %v2048
    %v2055 = vadd.f32 %v2000, %v2049
    %v2056 = vadd.f32 %v2001, %v2048
    %v2057 = vadd.f32 %v2002, %v2049
    %v2058 = vadd.f32 %v2003, %v2048
    %v2059 = vadd.f32 %v2004, %v2049
    %v2060 = vadd.f32 %v2005, %v2048
    %v2061 = vadd.f32 %v2006, %v2049
    %v2062 = vadd.f32 %v2007, %v2048
    %v2063 = vadd.f32 %v2008, %v2049
    %v2064 = vadd.f32 %v2009, %v2048
    %v2065 = vadd.f32 %v2010, %v2049
    %v2066 = vadd.f32 %v2011, %v2048
    %v2067 = vadd.f32 %v2012, %v2049
    %v2068 = vadd.f32 %v2013, %v2048
    %v2069 = vadd.f32 %v2014, %v2049
    %v2070 = vadd.f32 %v2015, %v2048
    %v2071 = vadd.f32 %v2016, %v2049
    %v2072 = vadd.f32 %v2017, %v2048
    %v2073 = vadd.f32 %v2018, %v2049
    %v2074 = vadd.f32 %v2019, %v2048
    %v2075 = vadd.f32 %v2020, %v2049
    %v2076 = vadd.f32 %v2021, %v2048
    %v2077 = vadd.f32 %v2022, %v2049
    %v2078 = vadd.f32 %v2023, %v2048
    %v2079 = vadd.f32 %v2024, %v2049
    %v2080 = vadd.f32 %v2025, %v2048
    %v2081 = vadd.f32 %v2026, %v2049
    %v2082 = vadd.f32 %v2027, %v2048
    %v2083 = vadd.f32 %v2028, %v2049
    %v2084 = vadd.f32 %v2029, %v2048
    %v2085 = vadd.f32 %v2030, %v2049
    %v2086 = vadd.f32 %v2031, %v2048
    %v2087 = vadd.f32 %v2032, %v2049
    %v2088 = vadd.f32 %v2033, %v2048
    %v2089 = vadd.f32 %v2034, %v2049
    %v2090 = vadd.f32 %v2035, %v2048
    %v2091 = vadd.f32 %v2036, %v2049
    %v2092 = vadd.f32 %v2037, %v2048
    %v2093 = vadd.f32 %v2038, %v2049
    %v2094 = vadd.f32 %v2039, %v2048
    %v2095 = vadd.f32 %v2040, %v2049
    %v2096 = vadd.f32 %v2041, %v2048
    %v2097 = vadd.f32 %v2042, %v2049
    %v2098 = vadd.f32 %v2043, %v2048
    %v2099 = vadd.f32 %v2044, %v2049
    %v2100 = vadd.f32 %v2045, %v2048
    %v2101 = vadd.f32 %v2046, %v2049
    %2102 = vst [vmem:[#allocation5] sm:$0xff] %v2052
    %2103 = vst [vmem:[#allocation5 + $0x8] sm:$0xff] %v2053
    %2104 = vst [vmem:[#allocation5 + $0x10] sm:$0xff] %v2054
    %2105 = vst [vmem:[#allocation5 + $0x18] sm:$0xff] %v2055
    %2106 = vst [vmem:[#allocation5 + $0x20] sm:$0xff] %v2056
    %2107 = vst [vmem:[#allocation5 + $0x28] sm:$0xff] %v2057
    %2108 = vst [vmem:[#allocation5 + $0x30] sm:$0xff] %v2058
    %2109 = vst [vmem:[#allocation5 + $0x38] sm:$0xff] %v2059
    %2110 = vst [vmem:[#allocation5 + $0x40] sm:$0xff] %v2060
    %2111 = vst [vmem:[#allocation5 + $0x48] sm:$0xff] %v2061
    %2112 = vst [vmem:[#allocation5 + $0x50] sm:$0xff] %v2062
    %2113 = vst [vmem:[#allocation5 + $0x58] sm:$0xff] %v2063
    %2114 = vst [vmem:[#allocation5 + $0x60] sm:$0xff] %v2064
    %2115 = vst [vmem:[#allocation5 + $0x68] sm:$0xff] %v2065
    %2116 = vst [vmem:[#allocation5 + $0x70] sm:$0xff] %v2066
    %2117 = vst [vmem:[#allocation5 + $0x78] sm:$0xff] %v2067
    %2118 = vst [vmem:[#allocation5 + $0x80] sm:$0xff] %v2068
    %2119 = vst [vmem:[#allocation5 + $0x88] sm:$0xff] %v2069
    %2120 = vst [vmem:[#allocation5 + $0x90] sm:$0xff] %v2070
    %2121 = vst [vmem:[#allocation5 + $0x98] sm:$0xff] %v2071
    %2122 = vst [vmem:[#allocation5 + $0xa0] sm:$0xff] %v2072
    %2123 = vst [vmem:[#allocation5 + $0xa8] sm:$0xff] %v2073
    %2124 = vst [vmem:[#allocation5 + $0xb0] sm:$0xff] %v2074
    %2125 = vst [vmem:[#allocation5 + $0xb8] sm:$0xff] %v2075
    %2126 = vst [vmem:[#allocation5 + $0xc0] sm:$0xff] %v2076
    %2127 = vst [vmem:[#allocation5 + $0xc8] sm:$0xff] %v2077
    %2128 = vst [vmem:[#allocation5 + $0xd0] sm:$0xff] %v2078
    %2129 = vst [vmem:[#allocation5 + $0xd8] sm:$0xff] %v2079
    %2130 = vst [vmem:[#allocation5 + $0xe0] sm:$0xff] %v2080
    %2131 = vst [vmem:[#allocation5 + $0xe8] sm:$0xff] %v2081
    %2132 = vst [vmem:[#allocation5 + $0xf0] sm:$0xff] %v2082
    %2133 = vst [vmem:[#allocation5 + $0xf8] sm:$0xff] %v2083
    %2134 = vst [vmem:[#allocation5 + $0x100] sm:$0xff] %v2084
    %2135 = vst [vmem:[#allocation5 + $0x108] sm:$0xff] %v2085
    %2136 = vst [vmem:[#allocation5 + $0x110] sm:$0xff] %v2086
    %2137 = vst [vmem:[#allocation5 + $0x118] sm:$0xff] %v2087
    %2138 = vst [vmem:[#allocation5 + $0x120] sm:$0xff] %v2088
    %2139 = vst [vmem:[#allocation5 + $0x128] sm:$0xff] %v2089
    %2140 = vst [vmem:[#allocation5 + $0x130] sm:$0xff] %v2090
    %2141 = vst [vmem:[#allocation5 + $0x138] sm:$0xff] %v2091
    %2142 = vst [vmem:[#allocation5 + $0x140] sm:$0xff] %v2092
    %2143 = vst [vmem:[#allocation5 + $0x148] sm:$0xff] %v2093
    %2144 = vst [vmem:[#allocation5 + $0x150] sm:$0xff] %v2094
    %2145 = vst [vmem:[#allocation5 + $0x158] sm:$0xff] %v2095
    %2146 = vst [vmem:[#allocation5 + $0x160] sm:$0xff] %v2096
    %2147 = vst [vmem:[#allocation5 + $0x168] sm:$0xff] %v2097
    %2148 = vst [vmem:[#allocation5 + $0x170] sm:$0xff] %v2098
    %2149 = vst [vmem:[#allocation5 + $0x178] sm:$0xff] %v2099
    %2150 = vst [vmem:[#allocation5 + $0x180] sm:$0xff] %v2100
    %2151 = vst [vmem:[#allocation5 + $0x188] sm:$0xff] %v2101
    // Predicated region
    $region22: #{tpu_custom_call.1} parent=1 // pred_check
      _
    $region23: #{tpu_custom_call.1} parent=1 // pred_check_branch
      %2153 = sbr.rel (0) target = $region25
    $region24: #{tpu_custom_call.1} parent=1 // pred_region
      %2155 = vsyncadd [#allocation4], 0
      %s2156 = sshll.u32 [#allocation5], 4
      %s2157 = int_to_ptr.vmem [resolvable:$true] %s2156
      %s2158 = sshll.u32 %s4, 4
      %s2159 = int_to_ptr.hbm [resolvable:$true] %s2158
      %2164 = dma.vmem_to_hbm [thread:$0]  %s2157, 6400, %s2159, [#allocation4], 256, 256, 16
    $region25: #{tpu_custom_call.1} parent=1 // pred_fallthru
      _
    // Predicated region
    $region26: #{tpu_custom_call.1} parent=1 // pred_check
      _
    $region27: #{tpu_custom_call.1} parent=1 // pred_check_branch
      %2166 = sbr.rel (0) target = $region29
    $region28: #{tpu_custom_call.1} parent=1 // pred_region
      %2168 = dma.done [#allocation4], 6400
    $region29: #{tpu_custom_call.1} parent=1 // pred_fallthru
      _
    %2169 = vsyncpa [#allocation3], 1
    %2170 = vsyncpa [#allocation4], 1

</llo_original>
